<compile_context>
chip_gen: v7x
topology: tpu7x:2x2x1
jax: 0.10.0
libtpu: 0.0.40
codegen_flags: <defaults>
</compile_context>

<pallas_src>
import functools

import jax
import jax.numpy as jnp
from jax.experimental import pallas as pl
from jax.experimental.pallas import tpu as pltpu


def _round_up(x, m):
    return ((x + m - 1) // m) * m


def _vmem_budget_bytes():
    """Scoped-VMEM budget: ~3/4 of physical (48 MiB on v7x, 96 MiB v5e/v6e)."""
    try:
        cap = int(getattr(pltpu.get_tpu_info(), "vmem_capacity_bytes",
                          64 * 1024 * 1024))
    except Exception:
        cap = 64 * 1024 * 1024
    return min((cap * 3) // 4, 112 * 1024 * 1024)


def _step_vmem_bytes(t, ep, n_pad, emb_resident, emit_new_emb):
    """Conservative per-step VMEM footprint (streams double-buffered)."""
    adj = 2 * t * t * 2                                    # bf16 adjacency tile
    emb = 2 * (n_pad if emb_resident else t) * ep * 2      # bf16 embedding
    sum_in = 2 * t * ep * 4                                # f32 running sum in
    out_emb = (2 * t * ep * 2) if emit_new_emb else 0      # bf16 new layer emb
    out_sum = 2 * t * ep * 4                               # f32 new running sum
    acc = t * ep * 4                                       # f32 accumulator
    return adj + emb + sum_in + out_emb + out_sum + acc


# -----------------------------------------------------------------------------
# Kernel 1: one LightGCN propagation layer, fused with the running layer-sum
#   new_emb = norm_adj @ cur_emb                    (tiled over (M, K))
#   new_sum = (run_sum + new_emb) * scale           (scale = 1 or 1/(L+1))
# -----------------------------------------------------------------------------
def _layer_kernel(adj_ref, emb_ref, sum_ref, *rest, scale, tk, emb_resident,
                  emit_new_emb):
    if emit_new_emb:
        new_emb_ref, new_sum_ref, acc_ref = rest
    else:
        new_emb_ref = None
        new_sum_ref, acc_ref = rest

    k = pl.program_id(1)

    @pl.when(k == 0)
    def _():
        acc_ref[...] = jnp.zeros_like(acc_ref)

    if emb_resident:
        # Whole bf16 embedding is VMEM-resident; slice the K-tile in-kernel.
        off = pl.multiple_of(k * tk, tk)
        emb_tile = emb_ref[pl.ds(off, tk), :]               # (tk, Ep) bf16
    else:
        emb_tile = emb_ref[...]                             # (tk, Ep) bf16

    # bf16 x bf16 MXU matmul, f32 accumulation.
    acc_ref[...] += jnp.dot(adj_ref[...], emb_tile,
                            preferred_element_type=jnp.float32)

    @pl.when(k == pl.num_programs(1) - 1)
    def _():
        if emit_new_emb:
            new_emb_ref[...] = acc_ref[...].astype(new_emb_ref.dtype)
        s = sum_ref[...] + acc_ref[...]
        if scale != 1.0:
            s = s * scale
        new_sum_ref[...] = s.astype(new_sum_ref.dtype)


def lightgcn_propagate(norm_adj_bf16, all_emb_f32, num_layers, *,
                       target_tile=2048):
    """final = mean_k(all_emb_k),  all_emb_k = norm_adj @ all_emb_{k-1}."""
    n, e = all_emb_f32.shape
    ep = _round_up(e, 128)                     # lane-dense embedding width
    if num_layers == 0:
        return all_emb_f32

    budget = int(_vmem_budget_bytes() * 0.9)
    t = min(target_tile, _round_up(n, 256))
    while t > 256 and _step_vmem_bytes(t, ep, _round_up(n, t), False, True) > budget:
        t //= 2
    n_pad = _round_up(n, t)                    # pad N instead of tile=N fallback
    emb_resident = _step_vmem_bytes(t, ep, n_pad, True, True) <= budget
    # NOTE(v7x): n_pad // t >= 2 lets the 'parallel' row axis split across the
    # two TensorCores; we do not shrink t just for that (step overhead wins).

    adj_p = jnp.pad(norm_adj_bf16, ((0, n_pad - n), (0, n_pad - n)))
    emb0_p = jnp.pad(all_emb_f32, ((0, n_pad - n), (0, ep - e)))

    grid = (n_pad // t, n_pad // t)
    adj_spec = pl.BlockSpec((t, t), lambda i, k: (i, k))
    emb_spec = (pl.BlockSpec((n_pad, ep), lambda i, k: (0, 0)) if emb_resident
                else pl.BlockSpec((t, ep), lambda i, k: (k, 0)))
    row_spec = pl.BlockSpec((t, ep), lambda i, k: (i, 0))

    emb_bytes = (n_pad * ep * 2 if emb_resident
                 else (n_pad // t) * n_pad * ep * 2)

    def make_call(scale, emit_new_emb):
        kern = functools.partial(_layer_kernel, scale=scale, tk=t,
                                 emb_resident=emb_resident,
                                 emit_new_emb=emit_new_emb)
        if emit_new_emb:
            out_shape = (jax.ShapeDtypeStruct((n_pad, ep), jnp.bfloat16),
                         jax.ShapeDtypeStruct((n_pad, ep), jnp.float32))
            out_specs = [row_spec, row_spec]
            aliases = {2: 1}                  # running sum updated in place
        else:                                 # last layer: new_emb is dead
            out_shape = jax.ShapeDtypeStruct((n_pad, ep), jnp.float32)
            out_specs = row_spec
            aliases = {2: 0}
        bytes_out = n_pad * ep * 4 + (n_pad * ep * 2 if emit_new_emb else 0)
        return pl.pallas_call(
            kern,
            out_shape=out_shape,
            grid_spec=pltpu.PrefetchScalarGridSpec(
                num_scalar_prefetch=0,
                grid=grid,
                in_specs=[adj_spec, emb_spec, row_spec],
                out_specs=out_specs,
                scratch_shapes=[pltpu.VMEM((t, ep), jnp.float32)],
            ),
            input_output_aliases=aliases,
            compiler_params=pltpu.CompilerParams(
                dimension_semantics=("parallel", "arbitrary"),
                vmem_limit_bytes=_vmem_budget_bytes(),
            ),
            cost_estimate=pl.CostEstimate(
                flops=2 * n_pad * n_pad * ep,
                transcendentals=0,
                bytes_accessed=(n_pad * n_pad * 2      # bf16 adjacency stream
                                + emb_bytes            # bf16 embedding reads
                                + n_pad * ep * 4       # running sum in
                                + bytes_out),          # outputs
            ),
        )

    call_mid = make_call(1.0, True) if num_layers > 1 else None
    call_last = make_call(1.0 / float(num_layers + 1), False)

    cur = emb0_p.astype(jnp.bfloat16)          # bf16 layer-embedding stream
    run_sum = emb0_p                           # f32, aliased in/out per layer
    for layer in range(num_layers):
        if layer == num_layers - 1:
            run_sum = call_last(adj_p, cur, run_sum)
        else:
            cur, run_sum = call_mid(adj_p, cur, run_sum)
    return run_sum[:n, :e]                     # mean already folded in


# -----------------------------------------------------------------------------
# Kernel 2: pairwise scoring  gamma = sum(users_emb * items_emb, dim=1)
# Lane-dense layout: inputs (E, Bp), output (1, Bp); Bp tiled over a grid.
# -----------------------------------------------------------------------------
def _score_kernel(u_ref, i_ref, out_ref):
    out_ref[...] = jnp.sum(u_ref[...] * i_ref[...], axis=0, keepdims=True)


def lightgcn_score(users_emb, items_emb):
    b, e = users_emb.shape
    bp = _round_up(b, 128)
    tb = next(c for c in (512, 256, 128) if bp % c == 0)
    u_t = jnp.pad(users_emb.T, ((0, 0), (0, bp - b)))
    i_t = jnp.pad(items_emb.T, ((0, 0), (0, bp - b)))
    out = pl.pallas_call(
        _score_kernel,
        out_shape=jax.ShapeDtypeStruct((1, bp), jnp.float32),
        grid=(bp // tb,),
        in_specs=[pl.BlockSpec((e, tb), lambda j: (0, j)),
                  pl.BlockSpec((e, tb), lambda j: (0, j))],
        out_specs=pl.BlockSpec((1, tb), lambda j: (0, j)),
        compiler_params=pltpu.CompilerParams(
            dimension_semantics=("parallel",)),
    )(u_t, i_t)
    return out[0, :b]                                       # (B,)


# -----------------------------------------------------------------------------
# Full forward (mirrors LightGCN.forward(users, items), eval mode: no dropout)
# -----------------------------------------------------------------------------
def lightgcn_forward(params, users, items, num_layers):
    users_w = params["users_emb"]       # (n_users, E) f32
    items_w = params["items_emb"]       # (m_items, E) f32
    norm_adj = params["norm_adj"]       # (N, N) bf16 dense normalized adjacency
    n_users = users_w.shape[0]

    all_emb = jnp.concatenate([users_w, items_w], axis=0)           # (N, E)
    final = lightgcn_propagate(norm_adj, all_emb, num_layers)       # (N, E)
    users_emb = final[:n_users][users]   # embedding gather (plain-JAX glue)
    items_emb = final[n_users:][items]
    return lightgcn_score(users_emb, items_emb)                     # (B,)


# -----------------------------------------------------------------------------
# Deterministic synthetic setup + reference
# -----------------------------------------------------------------------------
def build_norm_adj(key, n_users, m_items):
    """Symmetric-normalized bipartite adjacency D^{-1/2} A D^{-1/2} (dense)."""
    r = (jax.random.uniform(key, (n_users, m_items)) < 0.2).astype(jnp.float32)
    n = n_users + m_items
    a = jnp.zeros((n, n), jnp.float32)
    a = a.at[:n_users, n_users:].set(r)
    a = a.at[n_users:, :n_users].set(r.T)
    deg = a.sum(axis=1)
    d_inv_sqrt = jnp.where(deg > 0, 1.0 / jnp.sqrt(deg), 0.0)
    return a * d_inv_sqrt[:, None] * d_inv_sqrt[None, :]


def _reference_forward(params, users, items, num_layers):
    """Plain-JAX reference with the same bf16-operand / f32-accumulate matmul."""
    users_w, items_w = params["users_emb"], params["items_emb"]
    adj = params["norm_adj"]                                   # bf16
    n_users = users_w.shape[0]
    all_emb = jnp.concatenate([users_w, items_w], axis=0)
    embs = [all_emb]
    cur = all_emb
    for _ in range(num_layers):
        cur = jnp.dot(adj, cur.astype(jnp.bfloat16),
                      preferred_element_type=jnp.float32)
        embs.append(cur)
    final = jnp.mean(jnp.stack(embs, axis=1), axis=1)
    u = final[:n_users][users]
    it = final[n_users:][items]
    return jnp.sum(u * it, axis=1)


if __name__ == "__main__":
    n_users, m_items = 24, 40          # N = 64 total nodes (padded to 256)
    embedding_size = 32
    num_layers = 2
    batch = 8

    key = jax.random.PRNGKey(0)
    k_u, k_i, k_adj, k_uidx, k_iidx = jax.random.split(key, 5)

    params = {
        # nn.init.normal_(weight, std=0.1)
        "users_emb": 0.1 * jax.random.normal(k_u, (n_users, embedding_size),
                                             jnp.float32),
        "items_emb": 0.1 * jax.random.normal(k_i, (m_items, embedding_size),
                                             jnp.float32),
        # Adjacency stored in bf16 (halves the dominant HBM stream).
        "norm_adj": build_norm_adj(k_adj, n_users, m_items).astype(jnp.bfloat16),
    }

    users = jax.random.randint(k_uidx, (batch,), 0, n_users)
    items = jax.random.randint(k_iidx, (batch,), 0, m_items)

    fwd = jax.jit(functools.partial(lightgcn_forward, num_layers=num_layers))
    gamma = jax.block_until_ready(fwd(params, users, items))

    ref = _reference_forward(params, users, items, num_layers)
    assert gamma.shape == (batch,)
    assert jnp.allclose(gamma, ref, atol=1e-4, rtol=1e-4), (gamma, ref)

    print("KERNEL_OK")
</pallas_src>

<mosaic_0001>
module attributes {stable_mosaic.version = 11 : i64} {
  func.func @_layer_kernel(%arg0: i32, %arg1: i32, %arg2: memref<256x256xbf16, #tpu.memory_space<vmem>>, %arg3: memref<256x128xbf16, #tpu.memory_space<vmem>>, %arg4: memref<256x128xf32, #tpu.memory_space<vmem>>, %arg5: memref<256x128xbf16, #tpu.memory_space<vmem>>, %arg6: memref<256x128xf32, #tpu.memory_space<vmem>>, %arg7: memref<256x128xf32, #tpu.memory_space<vmem>>) attributes {dimension_semantics = [#tpu.dimension_semantics<parallel>, #tpu.dimension_semantics<arbitrary>], iteration_bounds = array<i64: 1, 1>, scalar_prefetch = 0 : i64, scratch_operands = 1 : i64, tpu.core_type = #tpu.core_type<tc>, window_params = [{transform_indices = @transform_0, window_bounds = array<i64: 256, 256>}, {pipeline_mode = #tpu.pipeline_mode<synchronous>, transform_indices = @transform_1, window_bounds = array<i64: 256, 128>}, {transform_indices = @transform_2, window_bounds = array<i64: 256, 128>}, {transform_indices = @transform_3, window_bounds = array<i64: 256, 128>}, {transform_indices = @transform_4, window_bounds = array<i64: 256, 128>}]} {
    %c0_i32 = arith.constant 0 : i32
    %0 = arith.cmpi eq, %arg1, %c0_i32 : i32
    %1 = arith.extui %0 : i1 to i32
    %c0_i32_0 = arith.constant 0 : i32
    %2 = arith.cmpi ne, %1, %c0_i32_0 : i32
    scf.if %2 {
      %cst_9 = arith.constant 0.000000e+00 : f32
      %15 = vector.broadcast %cst_9 : f32 to vector<256x128xf32>
      %c0_10 = arith.constant 0 : index
      %c0_11 = arith.constant 0 : index
      %16 = vector.load %arg7[%c0_10, %c0_11] : memref<256x128xf32, #tpu.memory_space<vmem>>, vector<256x128xf32>
      tpu.vector_store %arg7[%c0_10, %c0_11], %15 {strides = array<i32>} : memref<256x128xf32, #tpu.memory_space<vmem>>, vector<256x128xf32>,
    } else {
    }
    %c256_i32 = arith.constant 256 : i32
    %3 = arith.muli %arg1, %c256_i32 : i32
    %4 = tpu.assume_multiple %3, 256 : i32
    %5 = arith.index_cast %4 : i32 to index
    %c0 = arith.constant 0 : index
    %6 = vector.load %arg3[%5, %c0] : memref<256x128xbf16, #tpu.memory_space<vmem>>, vector<256x128xbf16>
    %c0_1 = arith.constant 0 : index
    %c0_2 = arith.constant 0 : index
    %7 = vector.load %arg7[%c0_1, %c0_2] : memref<256x128xf32, #tpu.memory_space<vmem>>, vector<256x128xf32>
    %c0_3 = arith.constant 0 : index
    %c0_4 = arith.constant 0 : index
    %8 = vector.load %arg2[%c0_3, %c0_4] : memref<256x256xbf16, #tpu.memory_space<vmem>>, vector<256x256xbf16>
    %cst = arith.constant dense<0.000000e+00> : vector<256x128xf32>
    %9 = tpu.matmul %8, %6, %cst {dimension_numbers = #tpu.dot_dimension_numbers<[1], [0], [0], [1], [0, 0, 1, 1], [], []>} : vector<256x256xbf16>, vector<256x128xbf16>, vector<256x128xf32> -> vector<256x128xf32>
    %10 = arith.addf %7, %9 : vector<256x128xf32>
    %c0_5 = arith.constant 0 : index
    %c0_6 = arith.constant 0 : index
    %11 = vector.load %arg7[%c0_5, %c0_6] : memref<256x128xf32, #tpu.memory_space<vmem>>, vector<256x128xf32>
    tpu.vector_store %arg7[%c0_5, %c0_6], %10 {strides = array<i32>} : memref<256x128xf32, #tpu.memory_space<vmem>>, vector<256x128xf32>,
    %c0_i32_7 = arith.constant 0 : i32
    %12 = arith.cmpi eq, %arg1, %c0_i32_7 : i32
    %13 = arith.extui %12 : i1 to i32
    %c0_i32_8 = arith.constant 0 : i32
    %14 = arith.cmpi ne, %13, %c0_i32_8 : i32
    scf.if %14 {
      %c0_9 = arith.constant 0 : index
      %c0_10 = arith.constant 0 : index
      %15 = vector.load %arg7[%c0_9, %c0_10] : memref<256x128xf32, #tpu.memory_space<vmem>>, vector<256x128xf32>
      %16 = arith.truncf %15 : vector<256x128xf32> to vector<256x128xbf16>
      %c0_11 = arith.constant 0 : index
      %c0_12 = arith.constant 0 : index
      %17 = vector.load %arg5[%c0_11, %c0_12] : memref<256x128xbf16, #tpu.memory_space<vmem>>, vector<256x128xbf16>
      tpu.vector_store %arg5[%c0_11, %c0_12], %16 {strides = array<i32>} : memref<256x128xbf16, #tpu.memory_space<vmem>>, vector<256x128xbf16>,
      %c0_13 = arith.constant 0 : index
      %c0_14 = arith.constant 0 : index
      %18 = vector.load %arg4[%c0_13, %c0_14] : memref<256x128xf32, #tpu.memory_space<vmem>>, vector<256x128xf32>
      %c0_15 = arith.constant 0 : index
      %c0_16 = arith.constant 0 : index
      %19 = vector.load %arg7[%c0_15, %c0_16] : memref<256x128xf32, #tpu.memory_space<vmem>>, vector<256x128xf32>
      %20 = arith.addf %18, %19 : vector<256x128xf32>
      %c0_17 = arith.constant 0 : index
      %c0_18 = arith.constant 0 : index
      %21 = vector.load %arg6[%c0_17, %c0_18] : memref<256x128xf32, #tpu.memory_space<vmem>>, vector<256x128xf32>
      tpu.vector_store %arg6[%c0_17, %c0_18], %20 {strides = array<i32>} : memref<256x128xf32, #tpu.memory_space<vmem>>, vector<256x128xf32>,
    } else {
    }
    return
  }
  func.func @transform_0(%arg0: i32, %arg1: i32) -> (i32, i32) {
    %c0_i32 = arith.constant 0 : i32
    return %arg0, %arg1 : i32, i32
  }
  func.func @transform_1(%arg0: i32, %arg1: i32) -> (i32, i32) {
    %c0_i32 = arith.constant 0 : i32
    %c0_i32_0 = arith.constant 0 : i32
    %c0_i32_1 = arith.constant 0 : i32
    return %c0_i32, %c0_i32_0 : i32, i32
  }
  func.func @transform_2(%arg0: i32, %arg1: i32) -> (i32, i32) {
    %c0_i32 = arith.constant 0 : i32
    %c0_i32_0 = arith.constant 0 : i32
    return %arg0, %c0_i32 : i32, i32
  }
  func.func @transform_3(%arg0: i32, %arg1: i32) -> (i32, i32) {
    %c0_i32 = arith.constant 0 : i32
    %c0_i32_0 = arith.constant 0 : i32
    return %arg0, %c0_i32 : i32, i32
  }
  func.func @transform_4(%arg0: i32, %arg1: i32) -> (i32, i32) {
    %c0_i32 = arith.constant 0 : i32
    %c0_i32_0 = arith.constant 0 : i32
    return %arg0, %c0_i32 : i32, i32
  }
}

module attributes {stable_mosaic.version = 11 : i64} {
  func.func @_layer_kernel(%arg0: i32, %arg1: i32, %arg2: memref<256x256xbf16, #tpu.memory_space<vmem>>, %arg3: memref<256x128xbf16, #tpu.memory_space<vmem>>, %arg4: memref<256x128xf32, #tpu.memory_space<vmem>>, %arg5: memref<256x128xf32, #tpu.memory_space<vmem>>, %arg6: memref<256x128xf32, #tpu.memory_space<vmem>>) attributes {dimension_semantics = [#tpu.dimension_semantics<parallel>, #tpu.dimension_semantics<arbitrary>], iteration_bounds = array<i64: 1, 1>, scalar_prefetch = 0 : i64, scratch_operands = 1 : i64, tpu.core_type = #tpu.core_type<tc>, window_params = [{transform_indices = @transform_0, window_bounds = array<i64: 256, 256>}, {pipeline_mode = #tpu.pipeline_mode<synchronous>, transform_indices = @transform_1, window_bounds = array<i64: 256, 128>}, {transform_indices = @transform_2, window_bounds = array<i64: 256, 128>}, {transform_indices = @transform_3, window_bounds = array<i64: 256, 128>}]} {
    %c0_i32 = arith.constant 0 : i32
    %0 = arith.cmpi eq, %arg1, %c0_i32 : i32
    %1 = arith.extui %0 : i1 to i32
    %c0_i32_0 = arith.constant 0 : i32
    %2 = arith.cmpi ne, %1, %c0_i32_0 : i32
    scf.if %2 {
      %cst_9 = arith.constant 0.000000e+00 : f32
      %15 = vector.broadcast %cst_9 : f32 to vector<256x128xf32>
      %c0_10 = arith.constant 0 : index
      %c0_11 = arith.constant 0 : index
      %16 = vector.load %arg6[%c0_10, %c0_11] : memref<256x128xf32, #tpu.memory_space<vmem>>, vector<256x128xf32>
      tpu.vector_store %arg6[%c0_10, %c0_11], %15 {strides = array<i32>} : memref<256x128xf32, #tpu.memory_space<vmem>>, vector<256x128xf32>,
    } else {
    }
    %c256_i32 = arith.constant 256 : i32
    %3 = arith.muli %arg1, %c256_i32 : i32
    %4 = tpu.assume_multiple %3, 256 : i32
    %5 = arith.index_cast %4 : i32 to index
    %c0 = arith.constant 0 : index
    %6 = vector.load %arg3[%5, %c0] : memref<256x128xbf16, #tpu.memory_space<vmem>>, vector<256x128xbf16>
    %c0_1 = arith.constant 0 : index
    %c0_2 = arith.constant 0 : index
    %7 = vector.load %arg6[%c0_1, %c0_2] : memref<256x128xf32, #tpu.memory_space<vmem>>, vector<256x128xf32>
    %c0_3 = arith.constant 0 : index
    %c0_4 = arith.constant 0 : index
    %8 = vector.load %arg2[%c0_3, %c0_4] : memref<256x256xbf16, #tpu.memory_space<vmem>>, vector<256x256xbf16>
    %cst = arith.constant dense<0.000000e+00> : vector<256x128xf32>
    %9 = tpu.matmul %8, %6, %cst {dimension_numbers = #tpu.dot_dimension_numbers<[1], [0], [0], [1], [0, 0, 1, 1], [], []>} : vector<256x256xbf16>, vector<256x128xbf16>, vector<256x128xf32> -> vector<256x128xf32>
    %10 = arith.addf %7, %9 : vector<256x128xf32>
    %c0_5 = arith.constant 0 : index
    %c0_6 = arith.constant 0 : index
    %11 = vector.load %arg6[%c0_5, %c0_6] : memref<256x128xf32, #tpu.memory_space<vmem>>, vector<256x128xf32>
    tpu.vector_store %arg6[%c0_5, %c0_6], %10 {strides = array<i32>} : memref<256x128xf32, #tpu.memory_space<vmem>>, vector<256x128xf32>,
    %c0_i32_7 = arith.constant 0 : i32
    %12 = arith.cmpi eq, %arg1, %c0_i32_7 : i32
    %13 = arith.extui %12 : i1 to i32
    %c0_i32_8 = arith.constant 0 : i32
    %14 = arith.cmpi ne, %13, %c0_i32_8 : i32
    scf.if %14 {
      %c0_9 = arith.constant 0 : index
      %c0_10 = arith.constant 0 : index
      %15 = vector.load %arg4[%c0_9, %c0_10] : memref<256x128xf32, #tpu.memory_space<vmem>>, vector<256x128xf32>
      %c0_11 = arith.constant 0 : index
      %c0_12 = arith.constant 0 : index
      %16 = vector.load %arg6[%c0_11, %c0_12] : memref<256x128xf32, #tpu.memory_space<vmem>>, vector<256x128xf32>
      %17 = arith.addf %15, %16 : vector<256x128xf32>
      %cst_13 = arith.constant 0.333333343 : f32
      %18 = vector.broadcast %cst_13 : f32 to vector<256x128xf32>
      %19 = arith.mulf %17, %18 : vector<256x128xf32>
      %c0_14 = arith.constant 0 : index
      %c0_15 = arith.constant 0 : index
      %20 = vector.load %arg5[%c0_14, %c0_15] : memref<256x128xf32, #tpu.memory_space<vmem>>, vector<256x128xf32>
      tpu.vector_store %arg5[%c0_14, %c0_15], %19 {strides = array<i32>} : memref<256x128xf32, #tpu.memory_space<vmem>>, vector<256x128xf32>,
    } else {
    }
    return
  }
  func.func @transform_0(%arg0: i32, %arg1: i32) -> (i32, i32) {
    %c0_i32 = arith.constant 0 : i32
    return %arg0, %arg1 : i32, i32
  }
  func.func @transform_1(%arg0: i32, %arg1: i32) -> (i32, i32) {
    %c0_i32 = arith.constant 0 : i32
    %c0_i32_0 = arith.constant 0 : i32
    %c0_i32_1 = arith.constant 0 : i32
    return %c0_i32, %c0_i32_0 : i32, i32
  }
  func.func @transform_2(%arg0: i32, %arg1: i32) -> (i32, i32) {
    %c0_i32 = arith.constant 0 : i32
    %c0_i32_0 = arith.constant 0 : i32
    return %arg0, %c0_i32 : i32, i32
  }
  func.func @transform_3(%arg0: i32, %arg1: i32) -> (i32, i32) {
    %c0_i32 = arith.constant 0 : i32
    %c0_i32_0 = arith.constant 0 : i32
    return %arg0, %c0_i32 : i32, i32
  }
}

module attributes {stable_mosaic.version = 11 : i64} {
  func.func @_score_kernel(%arg0: i32, %arg1: memref<32x128xf32, #tpu.memory_space<vmem>>, %arg2: memref<32x128xf32, #tpu.memory_space<vmem>>, %arg3: memref<1x128xf32, #tpu.memory_space<vmem>>) attributes {dimension_semantics = [#tpu.dimension_semantics<parallel>], iteration_bounds = array<i64: 1>, scalar_prefetch = 0 : i64, scratch_operands = 0 : i64, tpu.core_type = #tpu.core_type<tc>, window_params = [{transform_indices = @transform_0, window_bounds = array<i64: 32, 128>}, {transform_indices = @transform_1, window_bounds = array<i64: 32, 128>}, {transform_indices = @transform_2, window_bounds = array<i64: 1, 128>}]} {
    %c0 = arith.constant 0 : index
    %c0_0 = arith.constant 0 : index
    %0 = vector.load %arg1[%c0, %c0_0] : memref<32x128xf32, #tpu.memory_space<vmem>>, vector<32x128xf32>
    %c0_1 = arith.constant 0 : index
    %c0_2 = arith.constant 0 : index
    %1 = vector.load %arg2[%c0_1, %c0_2] : memref<32x128xf32, #tpu.memory_space<vmem>>, vector<32x128xf32>
    %2 = arith.mulf %0, %1 : vector<32x128xf32>
    %cst = arith.constant dense<0.000000e+00> : vector<128xf32>
    %3 = vector.multi_reduction <add>, %2, %cst [0] : vector<32x128xf32> to vector<128xf32>
    %4 = vector.shape_cast %3 : vector<128xf32> to vector<1x128xf32>
    %c0_3 = arith.constant 0 : index
    %c0_4 = arith.constant 0 : index
    %5 = vector.load %arg3[%c0_3, %c0_4] : memref<1x128xf32, #tpu.memory_space<vmem>>, vector<1x128xf32>
    tpu.vector_store %arg3[%c0_3, %c0_4], %4 {strides = array<i32>} : memref<1x128xf32, #tpu.memory_space<vmem>>, vector<1x128xf32>,
    return
  }
  func.func @transform_0(%arg0: i32) -> (i32, i32) {
    %c0_i32 = arith.constant 0 : i32
    %c0_i32_0 = arith.constant 0 : i32
    return %c0_i32, %arg0 : i32, i32
  }
  func.func @transform_1(%arg0: i32) -> (i32, i32) {
    %c0_i32 = arith.constant 0 : i32
    %c0_i32_0 = arith.constant 0 : i32
    return %c0_i32, %arg0 : i32, i32
  }
  func.func @transform_2(%arg0: i32) -> (i32, i32) {
    %c0_i32 = arith.constant 0 : i32
    %c0_i32_0 = arith.constant 0 : i32
    return %c0_i32, %arg0 : i32, i32
  }
}

</mosaic_0001>

<llo_original>
// kernel: lightgcn_forward.5
$region0: #{lightgcn_forward.5}
  #allocation0 [shape = 'u32[]', space=smem, size = 0x4, offset = 0x4, fixed_abs, tag = 'smem constant byte address 0x4 - core index']
  #allocation1 [shape = 'u32[144,128]{1,0:T(1,128)}', space=vmem, size = 0x12000, scoped, tag = 'internal scratch']
  %s0 = inlined_call_operand.vmem [shape: f32[32,128], index: 0, kind: input, shape index: {}]
  %s1 = inlined_call_operand.vmem [shape: f32[32,128], index: 1, kind: input, shape index: {}]
  %s2 = inlined_call_operand.vmem [shape: f32[1,128], index: 2, kind: output, shape index: {}]
  %s3 = sld [smem:[#allocation0]]
  $region18: #{lightgcn_forward.5} parent=0
    _
  %s5 = ssub.s32 1, %s3
  %s6 = scalar_select 0, %s5, %s3
  // Predicated region
  $region2: #{lightgcn_forward.5} parent=0 // pred_check
    _
  $region3: #{lightgcn_forward.5} parent=0 // pred_check_branch
    %8 = sbr.rel (0) target = $region5
  $region4: #{lightgcn_forward.5} parent=0 // pred_region
    _
  $region5: #{lightgcn_forward.5} parent=0 // pred_fallthru
    _
  // Predicated region
  $region6: #{lightgcn_forward.5} parent=0 // pred_check
    _
  $region7: #{lightgcn_forward.5} parent=0 // pred_check_branch
    %10 = sbr.rel (0) target = $region9
  $region8: #{lightgcn_forward.5} parent=0 // pred_region
    _
  $region9: #{lightgcn_forward.5} parent=0 // pred_fallthru
    _
  %v11 = vld [vmem:[%s0] sm:$0xff]
  %v12 = vld [vmem:[%s0 + $0x8] sm:$0xff]
  %v13 = vld [vmem:[%s0 + $0x10] sm:$0xff]
  %v14 = vld [vmem:[%s0 + $0x18] sm:$0xff]
  %v15 = vld [vmem:[%s1] sm:$0xff]
  %v16 = vld [vmem:[%s1 + $0x8] sm:$0xff]
  %v17 = vld [vmem:[%s1 + $0x10] sm:$0xff]
  %v18 = vld [vmem:[%s1 + $0x18] sm:$0xff]
  %v19 = vmul.f32 %v11, %v15
  %v20 = vmul.f32 %v12, %v16
  %v21 = vmul.f32 %v13, %v17
  %v22 = vmul.f32 %v14, %v18
  %v23 = vadd.f32 %v19, %v20
  %v24 = vadd.f32 %v23, %v21
  %v25 = vadd.f32 %v24, %v22
  %v26 = vrot.slane %v25, 4
  %v27 = vadd.f32 %v25, %v26
  %v28 = vrot.slane %v27, 2
  %v29 = vadd.f32 %v27, %v28
  %v30 = vrot.slane %v29, 1
  %v31 = vadd.f32 %v29, %v30
  %32 = vst [vmem:[%s2] sm:$0x1] %v31
  // Predicated region
  $region10: #{lightgcn_forward.5} parent=0 // pred_check
    _
  $region11: #{lightgcn_forward.5} parent=0 // pred_check_branch
    %34 = sbr.rel (0) target = $region13
  $region12: #{lightgcn_forward.5} parent=0 // pred_region
    _
  $region13: #{lightgcn_forward.5} parent=0 // pred_fallthru
    _
  // Predicated region
  $region14: #{lightgcn_forward.5} parent=0 // pred_check
    _
  $region15: #{lightgcn_forward.5} parent=0 // pred_check_branch
    %36 = sbr.rel (0) target = $region17
  $region16: #{lightgcn_forward.5} parent=0 // pred_region
    _
  $region17: #{lightgcn_forward.5} parent=0 // pred_fallthru
    _

// kernel: lightgcn_forward.4
$region0: #{lightgcn_forward.4}
  #allocation0 [shape = 'u32[]', space=smem, size = 0x4, offset = 0x4, fixed_abs, tag = 'smem constant byte address 0x4 - core index']
  #allocation1 [shape = 'u32[144,128]{1,0:T(1,128)}', space=vmem, size = 0x12000, scoped, tag = 'internal scratch']
  #allocation2 [shape = 'f32[256,128]{1,0:T(8,128)}', space=vmem, size = 0x20000, scoped, tag = 'scratch operand']
  %s0 = inlined_call_operand.vmem [shape: bf16[256,256], index: 0, kind: input, shape index: {}]
  %s1 = inlined_call_operand.vmem [shape: bf16[256,128], index: 1, kind: input, shape index: {}]
  %s2 = inlined_call_operand.vmem [shape: f32[256,128], index: 2, kind: input, shape index: {}, may-alias: {2,3}]
  %s3 = inlined_call_operand.vmem [shape: f32[256,128], index: 3, kind: output, shape index: {}, may-alias: {2,3}]
  %s4 = sld [smem:[#allocation0]]
  $region30: #{lightgcn_forward.4} parent=0
    _
  %s6 = ssub.s32 1, %s4
  %s7 = scalar_select 0, %s6, %s4
  // Predicated region
  $region2: #{lightgcn_forward.4} parent=0 // pred_check
    _
  $region3: #{lightgcn_forward.4} parent=0 // pred_check_branch
    %9 = sbr.rel (0) target = $region5
  $region4: #{lightgcn_forward.4} parent=0 // pred_region
    _
  $region5: #{lightgcn_forward.4} parent=0 // pred_fallthru
    _
  // Predicated region
  $region6: #{lightgcn_forward.4} parent=0 // pred_check
    _
  $region7: #{lightgcn_forward.4} parent=0 // pred_check_branch
    %11 = sbr.rel (0) target = $region9
  $region8: #{lightgcn_forward.4} parent=0 // pred_region
    _
  $region9: #{lightgcn_forward.4} parent=0 // pred_fallthru
    _
  // Predicated region
  $region10: #{lightgcn_forward.4} parent=0 // pred_check
    _
  $region11: #{lightgcn_forward.4} parent=0 // pred_check_branch
    %13 = sbr.rel (0) target = $region13
  $region12: #{lightgcn_forward.4} parent=0 // pred_region
    _
  $region13: #{lightgcn_forward.4} parent=0 // pred_fallthru
    _
  %p15 = scmp.eq.s32.totalorder 0, 0
  // Predicated region
  $region14: #{lightgcn_forward.4} parent=0 // pred_check
    %p16 = pneg %p15
  $region15: #{lightgcn_forward.4} parent=0 // pred_check_branch
    %18 = sbr.rel (%p16) target = $region17
  $region16: #{lightgcn_forward.4} parent=0 // pred_region
    %19 = vst [vmem:[#allocation2] sm:$0xff] 0.0
    %20 = vst [vmem:[#allocation2 + $0x8] sm:$0xff] 0.0
    %21 = vst [vmem:[#allocation2 + $0x10] sm:$0xff] 0.0
    %22 = vst [vmem:[#allocation2 + $0x18] sm:$0xff] 0.0
    %23 = vst [vmem:[#allocation2 + $0x20] sm:$0xff] 0.0
    %24 = vst [vmem:[#allocation2 + $0x28] sm:$0xff] 0.0
    %25 = vst [vmem:[#allocation2 + $0x30] sm:$0xff] 0.0
    %26 = vst [vmem:[#allocation2 + $0x38] sm:$0xff] 0.0
    %27 = vst [vmem:[#allocation2 + $0x40] sm:$0xff] 0.0
    %28 = vst [vmem:[#allocation2 + $0x48] sm:$0xff] 0.0
    %29 = vst [vmem:[#allocation2 + $0x50] sm:$0xff] 0.0
    %30 = vst [vmem:[#allocation2 + $0x58] sm:$0xff] 0.0
    %31 = vst [vmem:[#allocation2 + $0x60] sm:$0xff] 0.0
    %32 = vst [vmem:[#allocation2 + $0x68] sm:$0xff] 0.0
    %33 = vst [vmem:[#allocation2 + $0x70] sm:$0xff] 0.0
    %34 = vst [vmem:[#allocation2 + $0x78] sm:$0xff] 0.0
    %35 = vst [vmem:[#allocation2 + $0x80] sm:$0xff] 0.0
    %36 = vst [vmem:[#allocation2 + $0x88] sm:$0xff] 0.0
    %37 = vst [vmem:[#allocation2 + $0x90] sm:$0xff] 0.0
    %38 = vst [vmem:[#allocation2 + $0x98] sm:$0xff] 0.0
    %39 = vst [vmem:[#allocation2 + $0xa0] sm:$0xff] 0.0
    %40 = vst [vmem:[#allocation2 + $0xa8] sm:$0xff] 0.0
    %41 = vst [vmem:[#allocation2 + $0xb0] sm:$0xff] 0.0
    %42 = vst [vmem:[#allocation2 + $0xb8] sm:$0xff] 0.0
    %43 = vst [vmem:[#allocation2 + $0xc0] sm:$0xff] 0.0
    %44 = vst [vmem:[#allocation2 + $0xc8] sm:$0xff] 0.0
    %45 = vst [vmem:[#allocation2 + $0xd0] sm:$0xff] 0.0
    %46 = vst [vmem:[#allocation2 + $0xd8] sm:$0xff] 0.0
    %47 = vst [vmem:[#allocation2 + $0xe0] sm:$0xff] 0.0
    %48 = vst [vmem:[#allocation2 + $0xe8] sm:$0xff] 0.0
    %49 = vst [vmem:[#allocation2 + $0xf0] sm:$0xff] 0.0
    %50 = vst [vmem:[#allocation2 + $0xf8] sm:$0xff] 0.0
  $region17: #{lightgcn_forward.4} parent=0 // pred_fallthru
    _
  %s51 = smul.u32 0, 256
  %s52 = sshra.s32 %s51, 3
  %s53 = sand.u32 %s51, 7
  %s54 = smul.addr %s52, 4
  %s55 = scalar_lea.vmem %s1, %s54
  %v56 = vld [vmem:[%s55] sm:$0xf]
  %v57 = vld [vmem:[%s55 + $0x4] sm:$0xf]
  %v58 = vld [vmem:[%s55 + $0x8] sm:$0xf]
  %v59 = vld [vmem:[%s55 + $0xc] sm:$0xf]
  %v60 = vld [vmem:[%s55 + $0x10] sm:$0xf]
  %v61 = vld [vmem:[%s55 + $0x14] sm:$0xf]
  %v62 = vld [vmem:[%s55 + $0x18] sm:$0xf]
  %v63 = vld [vmem:[%s55 + $0x1c] sm:$0xf]
  %v64 = vld [vmem:[%s55 + $0x20] sm:$0xf]
  %v65 = vld [vmem:[%s55 + $0x24] sm:$0xf]
  %v66 = vld [vmem:[%s55 + $0x28] sm:$0xf]
  %v67 = vld [vmem:[%s55 + $0x2c] sm:$0xf]
  %v68 = vld [vmem:[%s55 + $0x30] sm:$0xf]
  %v69 = vld [vmem:[%s55 + $0x34] sm:$0xf]
  %v70 = vld [vmem:[%s55 + $0x38] sm:$0xf]
  %v71 = vld [vmem:[%s55 + $0x3c] sm:$0xf]
  %v72 = vld [vmem:[%s55 + $0x40] sm:$0xf]
  %v73 = vld [vmem:[%s55 + $0x44] sm:$0xf]
  %v74 = vld [vmem:[%s55 + $0x48] sm:$0xf]
  %v75 = vld [vmem:[%s55 + $0x4c] sm:$0xf]
  %v76 = vld [vmem:[%s55 + $0x50] sm:$0xf]
  %v77 = vld [vmem:[%s55 + $0x54] sm:$0xf]
  %v78 = vld [vmem:[%s55 + $0x58] sm:$0xf]
  %v79 = vld [vmem:[%s55 + $0x5c] sm:$0xf]
  %v80 = vld [vmem:[%s55 + $0x60] sm:$0xf]
  %v81 = vld [vmem:[%s55 + $0x64] sm:$0xf]
  %v82 = vld [vmem:[%s55 + $0x68] sm:$0xf]
  %v83 = vld [vmem:[%s55 + $0x6c] sm:$0xf]
  %v84 = vld [vmem:[%s55 + $0x70] sm:$0xf]
  %v85 = vld [vmem:[%s55 + $0x74] sm:$0xf]
  %v86 = vld [vmem:[%s55 + $0x78] sm:$0xf]
  %v87 = vld [vmem:[%s55 + $0x7c] sm:$0xf]
  %v88 = vld [vmem:[#allocation2] sm:$0xff]
  %v89 = vld [vmem:[#allocation2 + $0x8] sm:$0xff]
  %v90 = vld [vmem:[#allocation2 + $0x10] sm:$0xff]
  %v91 = vld [vmem:[#allocation2 + $0x18] sm:$0xff]
  %v92 = vld [vmem:[#allocation2 + $0x20] sm:$0xff]
  %v93 = vld [vmem:[#allocation2 + $0x28] sm:$0xff]
  %v94 = vld [vmem:[#allocation2 + $0x30] sm:$0xff]
  %v95 = vld [vmem:[#allocation2 + $0x38] sm:$0xff]
  %v96 = vld [vmem:[#allocation2 + $0x40] sm:$0xff]
  %v97 = vld [vmem:[#allocation2 + $0x48] sm:$0xff]
  %v98 = vld [vmem:[#allocation2 + $0x50] sm:$0xff]
  %v99 = vld [vmem:[#allocation2 + $0x58] sm:$0xff]
  %v100 = vld [vmem:[#allocation2 + $0x60] sm:$0xff]
  %v101 = vld [vmem:[#allocation2 + $0x68] sm:$0xff]
  %v102 = vld [vmem:[#allocation2 + $0x70] sm:$0xff]
  %v103 = vld [vmem:[#allocation2 + $0x78] sm:$0xff]
  %v104 = vld [vmem:[#allocation2 + $0x80] sm:$0xff]
  %v105 = vld [vmem:[#allocation2 + $0x88] sm:$0xff]
  %v106 = vld [vmem:[#allocation2 + $0x90] sm:$0xff]
  %v107 = vld [vmem:[#allocation2 + $0x98] sm:$0xff]
  %v108 = vld [vmem:[#allocation2 + $0xa0] sm:$0xff]
  %v109 = vld [vmem:[#allocation2 + $0xa8] sm:$0xff]
  %v110 = vld [vmem:[#allocation2 + $0xb0] sm:$0xff]
  %v111 = vld [vmem:[#allocation2 + $0xb8] sm:$0xff]
  %v112 = vld [vmem:[#allocation2 + $0xc0] sm:$0xff]
  %v113 = vld [vmem:[#allocation2 + $0xc8] sm:$0xff]
  %v114 = vld [vmem:[#allocation2 + $0xd0] sm:$0xff]
  %v115 = vld [vmem:[#allocation2 + $0xd8] sm:$0xff]
  %v116 = vld [vmem:[#allocation2 + $0xe0] sm:$0xff]
  %v117 = vld [vmem:[#allocation2 + $0xe8] sm:$0xff]
  %v118 = vld [vmem:[#allocation2 + $0xf0] sm:$0xff]
  %v119 = vld [vmem:[#allocation2 + $0xf8] sm:$0xff]
  %v120 = vld [vmem:[%s0] sm:$0xff]
  %v121 = vld [vmem:[%s0 + $0x8] sm:$0xff]
  %v122 = vld [vmem:[%s0 + $0x10] sm:$0xff]
  %v123 = vld [vmem:[%s0 + $0x18] sm:$0xff]
  %v124 = vld [vmem:[%s0 + $0x20] sm:$0xff]
  %v125 = vld [vmem:[%s0 + $0x28] sm:$0xff]
  %v126 = vld [vmem:[%s0 + $0x30] sm:$0xff]
  %v127 = vld [vmem:[%s0 + $0x38] sm:$0xff]
  %v128 = vld [vmem:[%s0 + $0x40] sm:$0xff]
  %v129 = vld [vmem:[%s0 + $0x48] sm:$0xff]
  %v130 = vld [vmem:[%s0 + $0x50] sm:$0xff]
  %v131 = vld [vmem:[%s0 + $0x58] sm:$0xff]
  %v132 = vld [vmem:[%s0 + $0x60] sm:$0xff]
  %v133 = vld [vmem:[%s0 + $0x68] sm:$0xff]
  %v134 = vld [vmem:[%s0 + $0x70] sm:$0xff]
  %v135 = vld [vmem:[%s0 + $0x78] sm:$0xff]
  %v136 = vld [vmem:[%s0 + $0x80] sm:$0xff]
  %v137 = vld [vmem:[%s0 + $0x88] sm:$0xff]
  %v138 = vld [vmem:[%s0 + $0x90] sm:$0xff]
  %v139 = vld [vmem:[%s0 + $0x98] sm:$0xff]
  %v140 = vld [vmem:[%s0 + $0xa0] sm:$0xff]
  %v141 = vld [vmem:[%s0 + $0xa8] sm:$0xff]
  %v142 = vld [vmem:[%s0 + $0xb0] sm:$0xff]
  %v143 = vld [vmem:[%s0 + $0xb8] sm:$0xff]
  %v144 = vld [vmem:[%s0 + $0xc0] sm:$0xff]
  %v145 = vld [vmem:[%s0 + $0xc8] sm:$0xff]
  %v146 = vld [vmem:[%s0 + $0xd0] sm:$0xff]
  %v147 = vld [vmem:[%s0 + $0xd8] sm:$0xff]
  %v148 = vld [vmem:[%s0 + $0xe0] sm:$0xff]
  %v149 = vld [vmem:[%s0 + $0xe8] sm:$0xff]
  %v150 = vld [vmem:[%s0 + $0xf0] sm:$0xff]
  %v151 = vld [vmem:[%s0 + $0xf8] sm:$0xff]
  %v184 = vunpack.c.l.b16 %v120
  %v185 = vunpack.c.h.b16 %v120
  %v186 = vunpack.c.l.b16 %v121
  %v187 = vunpack.c.h.b16 %v121
  %v188 = vunpack.c.l.b16 %v122
  %v189 = vunpack.c.h.b16 %v122
  %v190 = vunpack.c.l.b16 %v123
  %v191 = vunpack.c.h.b16 %v123
  %v192 = vunpack.c.l.b16 %v124
  %v193 = vunpack.c.h.b16 %v124
  %v194 = vunpack.c.l.b16 %v125
  %v195 = vunpack.c.h.b16 %v125
  %v196 = vunpack.c.l.b16 %v126
  %v197 = vunpack.c.h.b16 %v126
  %v198 = vunpack.c.l.b16 %v127
  %v199 = vunpack.c.h.b16 %v127
  %v200 = vunpack.c.l.b16 %v128
  %v201 = vunpack.c.h.b16 %v128
  %v202 = vunpack.c.l.b16 %v129
  %v203 = vunpack.c.h.b16 %v129
  %v204 = vunpack.c.l.b16 %v130
  %v205 = vunpack.c.h.b16 %v130
  %v206 = vunpack.c.l.b16 %v131
  %v207 = vunpack.c.h.b16 %v131
  %v208 = vunpack.c.l.b16 %v132
  %v209 = vunpack.c.h.b16 %v132
  %v210 = vunpack.c.l.b16 %v133
  %v211 = vunpack.c.h.b16 %v133
  %v212 = vunpack.c.l.b16 %v134
  %v213 = vunpack.c.h.b16 %v134
  %v214 = vunpack.c.l.b16 %v135
  %v215 = vunpack.c.h.b16 %v135
  %v216 = vunpack.c.l.b16 %v136
  %v217 = vunpack.c.h.b16 %v136
  %v218 = vunpack.c.l.b16 %v137
  %v219 = vunpack.c.h.b16 %v137
  %v220 = vunpack.c.l.b16 %v138
  %v221 = vunpack.c.h.b16 %v138
  %v222 = vunpack.c.l.b16 %v139
  %v223 = vunpack.c.h.b16 %v139
  %v224 = vunpack.c.l.b16 %v140
  %v225 = vunpack.c.h.b16 %v140
  %v226 = vunpack.c.l.b16 %v141
  %v227 = vunpack.c.h.b16 %v141
  %v228 = vunpack.c.l.b16 %v142
  %v229 = vunpack.c.h.b16 %v142
  %v230 = vunpack.c.l.b16 %v143
  %v231 = vunpack.c.h.b16 %v143
  %v232 = vunpack.c.l.b16 %v144
  %v233 = vunpack.c.h.b16 %v144
  %v234 = vunpack.c.l.b16 %v145
  %v235 = vunpack.c.h.b16 %v145
  %v236 = vunpack.c.l.b16 %v146
  %v237 = vunpack.c.h.b16 %v146
  %v238 = vunpack.c.l.b16 %v147
  %v239 = vunpack.c.h.b16 %v147
  %v240 = vunpack.c.l.b16 %v148
  %v241 = vunpack.c.h.b16 %v148
  %v242 = vunpack.c.l.b16 %v149
  %v243 = vunpack.c.h.b16 %v149
  %v244 = vunpack.c.l.b16 %v150
  %v245 = vunpack.c.h.b16 %v150
  %v246 = vunpack.c.l.b16 %v151
  %v247 = vunpack.c.h.b16 %v151
  %v248 = vpack.c.b16 %v186, %v184
  %v249 = vpack.c.b16 %v187, %v185
  %v250 = vpack.c.b16 %v190, %v188
  %v251 = vpack.c.b16 %v191, %v189
  %v252 = vpack.c.b16 %v194, %v192
  %v253 = vpack.c.b16 %v195, %v193
  %v254 = vpack.c.b16 %v198, %v196
  %v255 = vpack.c.b16 %v199, %v197
  %v256 = vpack.c.b16 %v202, %v200
  %v257 = vpack.c.b16 %v203, %v201
  %v258 = vpack.c.b16 %v206, %v204
  %v259 = vpack.c.b16 %v207, %v205
  %v260 = vpack.c.b16 %v210, %v208
  %v261 = vpack.c.b16 %v211, %v209
  %v262 = vpack.c.b16 %v214, %v212
  %v263 = vpack.c.b16 %v215, %v213
  %v264 = vpack.c.b16 %v218, %v216
  %v265 = vpack.c.b16 %v219, %v217
  %v266 = vpack.c.b16 %v222, %v220
  %v267 = vpack.c.b16 %v223, %v221
  %v268 = vpack.c.b16 %v226, %v224
  %v269 = vpack.c.b16 %v227, %v225
  %v270 = vpack.c.b16 %v230, %v228
  %v271 = vpack.c.b16 %v231, %v229
  %v272 = vpack.c.b16 %v234, %v232
  %v273 = vpack.c.b16 %v235, %v233
  %v274 = vpack.c.b16 %v238, %v236
  %v275 = vpack.c.b16 %v239, %v237
  %v276 = vpack.c.b16 %v242, %v240
  %v277 = vpack.c.b16 %v243, %v241
  %v278 = vpack.c.b16 %v246, %v244
  %v279 = vpack.c.b16 %v247, %v245
  %v344 = vunpack.c.l.b16 %v56
  %v345 = vunpack.c.l.b16 %v57
  %v346 = vunpack.c.l.b16 %v58
  %v347 = vunpack.c.l.b16 %v59
  %v348 = vunpack.c.l.b16 %v60
  %v349 = vunpack.c.l.b16 %v61
  %v350 = vunpack.c.l.b16 %v62
  %v351 = vunpack.c.l.b16 %v63
  %v352 = vunpack.c.l.b16 %v64
  %v353 = vunpack.c.l.b16 %v65
  %v354 = vunpack.c.l.b16 %v66
  %v355 = vunpack.c.l.b16 %v67
  %v356 = vunpack.c.l.b16 %v68
  %v357 = vunpack.c.l.b16 %v69
  %v358 = vunpack.c.l.b16 %v70
  %v359 = vunpack.c.l.b16 %v71
  %v360 = vunpack.c.l.b16 %v72
  %v361 = vunpack.c.l.b16 %v73
  %v362 = vunpack.c.l.b16 %v74
  %v363 = vunpack.c.l.b16 %v75
  %v364 = vunpack.c.l.b16 %v76
  %v365 = vunpack.c.l.b16 %v77
  %v366 = vunpack.c.l.b16 %v78
  %v367 = vunpack.c.l.b16 %v79
  %v368 = vunpack.c.l.b16 %v80
  %v369 = vunpack.c.l.b16 %v81
  %v370 = vunpack.c.l.b16 %v82
  %v371 = vunpack.c.l.b16 %v83
  %v372 = vunpack.c.l.b16 %v84
  %v373 = vunpack.c.l.b16 %v85
  %v374 = vunpack.c.l.b16 %v86
  %v375 = vunpack.c.l.b16 %v87
  %v376 = vpack.c.b16 %v345, %v344
  %v377 = vpack.c.b16 %v347, %v346
  %v378 = vpack.c.b16 %v349, %v348
  %v379 = vpack.c.b16 %v351, %v350
  %v380 = vpack.c.b16 %v353, %v352
  %v381 = vpack.c.b16 %v355, %v354
  %v382 = vpack.c.b16 %v357, %v356
  %v383 = vpack.c.b16 %v359, %v358
  %v384 = vpack.c.b16 %v361, %v360
  %v385 = vpack.c.b16 %v363, %v362
  %v386 = vpack.c.b16 %v365, %v364
  %v387 = vpack.c.b16 %v367, %v366
  %v388 = vpack.c.b16 %v369, %v368
  %v389 = vpack.c.b16 %v371, %v370
  %v390 = vpack.c.b16 %v373, %v372
  %v391 = vpack.c.b16 %v375, %v374
  %408 = vmatprep.subr.bf16.mxu0 0
  %409 = vmatpush1.bf16.msra.mxu0 %v376
  %410 = vmatprep.subr.bf16.mxu0 0
  %411 = vmatpush1.bf16.msra.mxu0 %v377
  %412 = vmatprep.subr.bf16.mxu0 0
  %413 = vmatpush1.bf16.msra.mxu0 %v378
  %414 = vmatprep.subr.bf16.mxu0 0
  %415 = vmatpush1.bf16.msra.mxu0 %v379
  %416 = vmatprep.subr.bf16.mxu0 0
  %417 = vmatpush1.bf16.msra.mxu0 %v380
  %418 = vmatprep.subr.bf16.mxu0 0
  %419 = vmatpush1.bf16.msra.mxu0 %v381
  %420 = vmatprep.subr.bf16.mxu0 0
  %421 = vmatpush1.bf16.msra.mxu0 %v382
  %422 = vmatprep.subr.bf16.mxu0 0
  %423 = vmatpush1.bf16.msra.mxu0 %v383
  %424 = vmatprep.subr.bf16.mxu0 0
  %425 = vmatpush1.bf16.msra.mxu0 %v384
  %426 = vmatprep.subr.bf16.mxu0 0
  %427 = vmatpush1.bf16.msra.mxu0 %v385
  %428 = vmatprep.subr.bf16.mxu0 0
  %429 = vmatpush1.bf16.msra.mxu0 %v386
  %430 = vmatprep.subr.bf16.mxu0 0
  %431 = vmatpush1.bf16.msra.mxu0 %v387
  %432 = vmatprep.subr.bf16.mxu0 0
  %433 = vmatpush1.bf16.msra.mxu0 %v388
  %434 = vmatprep.subr.bf16.mxu0 0
  %435 = vmatpush1.bf16.msra.mxu0 %v389
  %436 = vmatprep.subr.bf16.mxu0 0
  %437 = vmatpush1.bf16.msra.mxu0 %v390
  %438 = vmatprep.subr.bf16.mxu0 0
  %439 = vmatpush1.bf16.msra.mxu0 %v391
  %440 = vmatprep.mubr.bf16.mxu0 %v249
  %441 = vmatmul.mubr.bf16.gmra.mrb[0].mxu0 %v248
  %v442 = vpop.f32.mrb[0].mxu0
  %v443 = vadd.f32 0.0, %v442
  %v444 = vpop.f32.mrb[0].mxu0
  %v445 = vpop.f32.mrb[0].mxu0
  %v446 = vadd.f32 0.0, %v445
  %v447 = vpop.f32.mrb[0].mxu0
  %448 = vmatprep.mubr.bf16.mxu0 %v251
  %449 = vmatmul.mubr.bf16.gmra.mrb[0].mxu0 %v250
  %v450 = vpop.f32.mrb[0].mxu0
  %v451 = vadd.f32 0.0, %v450
  %v452 = vpop.f32.mrb[0].mxu0
  %v453 = vpop.f32.mrb[0].mxu0
  %v454 = vadd.f32 0.0, %v453
  %v455 = vpop.f32.mrb[0].mxu0
  %456 = vmatprep.mubr.bf16.mxu0 %v253
  %457 = vmatmul.mubr.bf16.gmra.mrb[0].mxu0 %v252
  %v458 = vpop.f32.mrb[0].mxu0
  %v459 = vadd.f32 0.0, %v458
  %v460 = vpop.f32.mrb[0].mxu0
  %v461 = vpop.f32.mrb[0].mxu0
  %v462 = vadd.f32 0.0, %v461
  %v463 = vpop.f32.mrb[0].mxu0
  %464 = vmatprep.mubr.bf16.mxu0 %v255
  %465 = vmatmul.mubr.bf16.gmra.mrb[0].mxu0 %v254
  %v466 = vpop.f32.mrb[0].mxu0
  %v467 = vadd.f32 0.0, %v466
  %v468 = vpop.f32.mrb[0].mxu0
  %v469 = vpop.f32.mrb[0].mxu0
  %v470 = vadd.f32 0.0, %v469
  %v471 = vpop.f32.mrb[0].mxu0
  %472 = vmatprep.mubr.bf16.mxu0 %v257
  %473 = vmatmul.mubr.bf16.gmra.mrb[0].mxu0 %v256
  %v474 = vpop.f32.mrb[0].mxu0
  %v475 = vadd.f32 0.0, %v474
  %v476 = vpop.f32.mrb[0].mxu0
  %v477 = vpop.f32.mrb[0].mxu0
  %v478 = vadd.f32 0.0, %v477
  %v479 = vpop.f32.mrb[0].mxu0
  %480 = vmatprep.mubr.bf16.mxu0 %v259
  %481 = vmatmul.mubr.bf16.gmra.mrb[0].mxu0 %v258
  %v482 = vpop.f32.mrb[0].mxu0
  %v483 = vadd.f32 0.0, %v482
  %v484 = vpop.f32.mrb[0].mxu0
  %v485 = vpop.f32.mrb[0].mxu0
  %v486 = vadd.f32 0.0, %v485
  %v487 = vpop.f32.mrb[0].mxu0
  %488 = vmatprep.mubr.bf16.mxu0 %v261
  %489 = vmatmul.mubr.bf16.gmra.mrb[0].mxu0 %v260
  %v490 = vpop.f32.mrb[0].mxu0
  %v491 = vadd.f32 0.0, %v490
  %v492 = vpop.f32.mrb[0].mxu0
  %v493 = vpop.f32.mrb[0].mxu0
  %v494 = vadd.f32 0.0, %v493
  %v495 = vpop.f32.mrb[0].mxu0
  %496 = vmatprep.mubr.bf16.mxu0 %v263
  %497 = vmatmul.mubr.bf16.gmra.mrb[0].mxu0 %v262
  %v498 = vpop.f32.mrb[0].mxu0
  %v499 = vadd.f32 0.0, %v498
  %v500 = vpop.f32.mrb[0].mxu0
  %v501 = vpop.f32.mrb[0].mxu0
  %v502 = vadd.f32 0.0, %v501
  %v503 = vpop.f32.mrb[0].mxu0
  %504 = vmatprep.mubr.bf16.mxu0 %v265
  %505 = vmatmul.mubr.bf16.gmra.mrb[0].mxu0 %v264
  %v506 = vpop.f32.mrb[0].mxu0
  %v507 = vadd.f32 0.0, %v506
  %v508 = vpop.f32.mrb[0].mxu0
  %v509 = vpop.f32.mrb[0].mxu0
  %v510 = vadd.f32 0.0, %v509
  %v511 = vpop.f32.mrb[0].mxu0
  %512 = vmatprep.mubr.bf16.mxu0 %v267
  %513 = vmatmul.mubr.bf16.gmra.mrb[0].mxu0 %v266
  %v514 = vpop.f32.mrb[0].mxu0
  %v515 = vadd.f32 0.0, %v514
  %v516 = vpop.f32.mrb[0].mxu0
  %v517 = vpop.f32.mrb[0].mxu0
  %v518 = vadd.f32 0.0, %v517
  %v519 = vpop.f32.mrb[0].mxu0
  %520 = vmatprep.mubr.bf16.mxu0 %v269
  %521 = vmatmul.mubr.bf16.gmra.mrb[0].mxu0 %v268
  %v522 = vpop.f32.mrb[0].mxu0
  %v523 = vadd.f32 0.0, %v522
  %v524 = vpop.f32.mrb[0].mxu0
  %v525 = vpop.f32.mrb[0].mxu0
  %v526 = vadd.f32 0.0, %v525
  %v527 = vpop.f32.mrb[0].mxu0
  %528 = vmatprep.mubr.bf16.mxu0 %v271
  %529 = vmatmul.mubr.bf16.gmra.mrb[0].mxu0 %v270
  %v530 = vpop.f32.mrb[0].mxu0
  %v531 = vadd.f32 0.0, %v530
  %v532 = vpop.f32.mrb[0].mxu0
  %v533 = vpop.f32.mrb[0].mxu0
  %v534 = vadd.f32 0.0, %v533
  %v535 = vpop.f32.mrb[0].mxu0
  %536 = vmatprep.mubr.bf16.mxu0 %v273
  %537 = vmatmul.mubr.bf16.gmra.mrb[0].mxu0 %v272
  %v538 = vpop.f32.mrb[0].mxu0
  %v539 = vadd.f32 0.0, %v538
  %v540 = vpop.f32.mrb[0].mxu0
  %v541 = vpop.f32.mrb[0].mxu0
  %v542 = vadd.f32 0.0, %v541
  %v543 = vpop.f32.mrb[0].mxu0
  %544 = vmatprep.mubr.bf16.mxu0 %v275
  %545 = vmatmul.mubr.bf16.gmra.mrb[0].mxu0 %v274
  %v546 = vpop.f32.mrb[0].mxu0
  %v547 = vadd.f32 0.0, %v546
  %v548 = vpop.f32.mrb[0].mxu0
  %v549 = vpop.f32.mrb[0].mxu0
  %v550 = vadd.f32 0.0, %v549
  %v551 = vpop.f32.mrb[0].mxu0
  %552 = vmatprep.mubr.bf16.mxu0 %v277
  %553 = vmatmul.mubr.bf16.gmra.mrb[0].mxu0 %v276
  %v554 = vpop.f32.mrb[0].mxu0
  %v555 = vadd.f32 0.0, %v554
  %v556 = vpop.f32.mrb[0].mxu0
  %v557 = vpop.f32.mrb[0].mxu0
  %v558 = vadd.f32 0.0, %v557
  %v559 = vpop.f32.mrb[0].mxu0
  %560 = vmatprep.mubr.bf16.mxu0 %v279
  %561 = vmatmul.mubr.bf16.gmra.mrb[0].mxu0 %v278
  %v562 = vpop.f32.mrb[0].mxu0
  %v563 = vadd.f32 0.0, %v562
  %v564 = vpop.f32.mrb[0].mxu0
  %v565 = vpop.f32.mrb[0].mxu0
  %v566 = vadd.f32 0.0, %v565
  %v567 = vpop.f32.mrb[0].mxu0
  %568 = vdwg.mxu0
  %v569 = vadd.f32 %v88, %v443
  %v570 = vadd.f32 %v89, %v446
  %v571 = vadd.f32 %v90, %v451
  %v572 = vadd.f32 %v91, %v454
  %v573 = vadd.f32 %v92, %v459
  %v574 = vadd.f32 %v93, %v462
  %v575 = vadd.f32 %v94, %v467
  %v576 = vadd.f32 %v95, %v470
  %v577 = vadd.f32 %v96, %v475
  %v578 = vadd.f32 %v97, %v478
  %v579 = vadd.f32 %v98, %v483
  %v580 = vadd.f32 %v99, %v486
  %v581 = vadd.f32 %v100, %v491
  %v582 = vadd.f32 %v101, %v494
  %v583 = vadd.f32 %v102, %v499
  %v584 = vadd.f32 %v103, %v502
  %v585 = vadd.f32 %v104, %v507
  %v586 = vadd.f32 %v105, %v510
  %v587 = vadd.f32 %v106, %v515
  %v588 = vadd.f32 %v107, %v518
  %v589 = vadd.f32 %v108, %v523
  %v590 = vadd.f32 %v109, %v526
  %v591 = vadd.f32 %v110, %v531
  %v592 = vadd.f32 %v111, %v534
  %v593 = vadd.f32 %v112, %v539
  %v594 = vadd.f32 %v113, %v542
  %v595 = vadd.f32 %v114, %v547
  %v596 = vadd.f32 %v115, %v550
  %v597 = vadd.f32 %v116, %v555
  %v598 = vadd.f32 %v117, %v558
  %v599 = vadd.f32 %v118, %v563
  %v600 = vadd.f32 %v119, %v566
  %601 = vst [vmem:[#allocation2] sm:$0xff] %v569
  %602 = vst [vmem:[#allocation2 + $0x8] sm:$0xff] %v570
  %603 = vst [vmem:[#allocation2 + $0x10] sm:$0xff] %v571
  %604 = vst [vmem:[#allocation2 + $0x18] sm:$0xff] %v572
  %605 = vst [vmem:[#allocation2 + $0x20] sm:$0xff] %v573
  %606 = vst [vmem:[#allocation2 + $0x28] sm:$0xff] %v574
  %607 = vst [vmem:[#allocation2 + $0x30] sm:$0xff] %v575
  %608 = vst [vmem:[#allocation2 + $0x38] sm:$0xff] %v576
  %609 = vst [vmem:[#allocation2 + $0x40] sm:$0xff] %v577
  %610 = vst [vmem:[#allocation2 + $0x48] sm:$0xff] %v578
  %611 = vst [vmem:[#allocation2 + $0x50] sm:$0xff] %v579
  %612 = vst [vmem:[#allocation2 + $0x58] sm:$0xff] %v580
  %613 = vst [vmem:[#allocation2 + $0x60] sm:$0xff] %v581
  %614 = vst [vmem:[#allocation2 + $0x68] sm:$0xff] %v582
  %615 = vst [vmem:[#allocation2 + $0x70] sm:$0xff] %v583
  %616 = vst [vmem:[#allocation2 + $0x78] sm:$0xff] %v584
  %617 = vst [vmem:[#allocation2 + $0x80] sm:$0xff] %v585
  %618 = vst [vmem:[#allocation2 + $0x88] sm:$0xff] %v586
  %619 = vst [vmem:[#allocation2 + $0x90] sm:$0xff] %v587
  %620 = vst [vmem:[#allocation2 + $0x98] sm:$0xff] %v588
  %621 = vst [vmem:[#allocation2 + $0xa0] sm:$0xff] %v589
  %622 = vst [vmem:[#allocation2 + $0xa8] sm:$0xff] %v590
  %623 = vst [vmem:[#allocation2 + $0xb0] sm:$0xff] %v591
  %624 = vst [vmem:[#allocation2 + $0xb8] sm:$0xff] %v592
  %625 = vst [vmem:[#allocation2 + $0xc0] sm:$0xff] %v593
  %626 = vst [vmem:[#allocation2 + $0xc8] sm:$0xff] %v594
  %627 = vst [vmem:[#allocation2 + $0xd0] sm:$0xff] %v595
  %628 = vst [vmem:[#allocation2 + $0xd8] sm:$0xff] %v596
  %629 = vst [vmem:[#allocation2 + $0xe0] sm:$0xff] %v597
  %630 = vst [vmem:[#allocation2 + $0xe8] sm:$0xff] %v598
  %631 = vst [vmem:[#allocation2 + $0xf0] sm:$0xff] %v599
  %632 = vst [vmem:[#allocation2 + $0xf8] sm:$0xff] %v600
  // Predicated region
  $region18: #{lightgcn_forward.4} parent=0 // pred_check
    %p633 = pneg %p15
  $region19: #{lightgcn_forward.4} parent=0 // pred_check_branch
    %635 = sbr.rel (%p633) target = $region21
  $region20: #{lightgcn_forward.4} parent=0 // pred_region
    %v636 = vld [vmem:[%s2] sm:$0xff]
    %v637 = vld [vmem:[%s2 + $0x8] sm:$0xff]
    %v638 = vld [vmem:[%s2 + $0x10] sm:$0xff]
    %v639 = vld [vmem:[%s2 + $0x18] sm:$0xff]
    %v640 = vld [vmem:[%s2 + $0x20] sm:$0xff]
    %v641 = vld [vmem:[%s2 + $0x28] sm:$0xff]
    %v642 = vld [vmem:[%s2 + $0x30] sm:$0xff]
    %v643 = vld [vmem:[%s2 + $0x38] sm:$0xff]
    %v644 = vld [vmem:[%s2 + $0x40] sm:$0xff]
    %v645 = vld [vmem:[%s2 + $0x48] sm:$0xff]
    %v646 = vld [vmem:[%s2 + $0x50] sm:$0xff]
    %v647 = vld [vmem:[%s2 + $0x58] sm:$0xff]
    %v648 = vld [vmem:[%s2 + $0x60] sm:$0xff]
    %v649 = vld [vmem:[%s2 + $0x68] sm:$0xff]
    %v650 = vld [vmem:[%s2 + $0x70] sm:$0xff]
    %v651 = vld [vmem:[%s2 + $0x78] sm:$0xff]
    %v652 = vld [vmem:[%s2 + $0x80] sm:$0xff]
    %v653 = vld [vmem:[%s2 + $0x88] sm:$0xff]
    %v654 = vld [vmem:[%s2 + $0x90] sm:$0xff]
    %v655 = vld [vmem:[%s2 + $0x98] sm:$0xff]
    %v656 = vld [vmem:[%s2 + $0xa0] sm:$0xff]
    %v657 = vld [vmem:[%s2 + $0xa8] sm:$0xff]
    %v658 = vld [vmem:[%s2 + $0xb0] sm:$0xff]
    %v659 = vld [vmem:[%s2 + $0xb8] sm:$0xff]
    %v660 = vld [vmem:[%s2 + $0xc0] sm:$0xff]
    %v661 = vld [vmem:[%s2 + $0xc8] sm:$0xff]
    %v662 = vld [vmem:[%s2 + $0xd0] sm:$0xff]
    %v663 = vld [vmem:[%s2 + $0xd8] sm:$0xff]
    %v664 = vld [vmem:[%s2 + $0xe0] sm:$0xff]
    %v665 = vld [vmem:[%s2 + $0xe8] sm:$0xff]
    %v666 = vld [vmem:[%s2 + $0xf0] sm:$0xff]
    %v667 = vld [vmem:[%s2 + $0xf8] sm:$0xff]
    %v668 = vld [vmem:[#allocation2] sm:$0xff]
    %v669 = vld [vmem:[#allocation2 + $0x8] sm:$0xff]
    %v670 = vld [vmem:[#allocation2 + $0x10] sm:$0xff]
    %v671 = vld [vmem:[#allocation2 + $0x18] sm:$0xff]
    %v672 = vld [vmem:[#allocation2 + $0x20] sm:$0xff]
    %v673 = vld [vmem:[#allocation2 + $0x28] sm:$0xff]
    %v674 = vld [vmem:[#allocation2 + $0x30] sm:$0xff]
    %v675 = vld [vmem:[#allocation2 + $0x38] sm:$0xff]
    %v676 = vld [vmem:[#allocation2 + $0x40] sm:$0xff]
    %v677 = vld [vmem:[#allocation2 + $0x48] sm:$0xff]
    %v678 = vld [vmem:[#allocation2 + $0x50] sm:$0xff]
    %v679 = vld [vmem:[#allocation2 + $0x58] sm:$0xff]
    %v680 = vld [vmem:[#allocation2 + $0x60] sm:$0xff]
    %v681 = vld [vmem:[#allocation2 + $0x68] sm:$0xff]
    %v682 = vld [vmem:[#allocation2 + $0x70] sm:$0xff]
    %v683 = vld [vmem:[#allocation2 + $0x78] sm:$0xff]
    %v684 = vld [vmem:[#allocation2 + $0x80] sm:$0xff]
    %v685 = vld [vmem:[#allocation2 + $0x88] sm:$0xff]
    %v686 = vld [vmem:[#allocation2 + $0x90] sm:$0xff]
    %v687 = vld [vmem:[#allocation2 + $0x98] sm:$0xff]
    %v688 = vld [vmem:[#allocation2 + $0xa0] sm:$0xff]
    %v689 = vld [vmem:[#allocation2 + $0xa8] sm:$0xff]
    %v690 = vld [vmem:[#allocation2 + $0xb0] sm:$0xff]
    %v691 = vld [vmem:[#allocation2 + $0xb8] sm:$0xff]
    %v692 = vld [vmem:[#allocation2 + $0xc0] sm:$0xff]
    %v693 = vld [vmem:[#allocation2 + $0xc8] sm:$0xff]
    %v694 = vld [vmem:[#allocation2 + $0xd0] sm:$0xff]
    %v695 = vld [vmem:[#allocation2 + $0xd8] sm:$0xff]
    %v696 = vld [vmem:[#allocation2 + $0xe0] sm:$0xff]
    %v697 = vld [vmem:[#allocation2 + $0xe8] sm:$0xff]
    %v698 = vld [vmem:[#allocation2 + $0xf0] sm:$0xff]
    %v699 = vld [vmem:[#allocation2 + $0xf8] sm:$0xff]
    %v700 = vadd.f32 %v636, %v668
    %v701 = vadd.f32 %v637, %v669
    %v702 = vadd.f32 %v638, %v670
    %v703 = vadd.f32 %v639, %v671
    %v704 = vadd.f32 %v640, %v672
    %v705 = vadd.f32 %v641, %v673
    %v706 = vadd.f32 %v642, %v674
    %v707 = vadd.f32 %v643, %v675
    %v708 = vadd.f32 %v644, %v676
    %v709 = vadd.f32 %v645, %v677
    %v710 = vadd.f32 %v646, %v678
    %v711 = vadd.f32 %v647, %v679
    %v712 = vadd.f32 %v648, %v680
    %v713 = vadd.f32 %v649, %v681
    %v714 = vadd.f32 %v650, %v682
    %v715 = vadd.f32 %v651, %v683
    %v716 = vadd.f32 %v652, %v684
    %v717 = vadd.f32 %v653, %v685
    %v718 = vadd.f32 %v654, %v686
    %v719 = vadd.f32 %v655, %v687
    %v720 = vadd.f32 %v656, %v688
    %v721 = vadd.f32 %v657, %v689
    %v722 = vadd.f32 %v658, %v690
    %v723 = vadd.f32 %v659, %v691
    %v724 = vadd.f32 %v660, %v692
    %v725 = vadd.f32 %v661, %v693
    %v726 = vadd.f32 %v662, %v694
    %v727 = vadd.f32 %v663, %v695
    %v728 = vadd.f32 %v664, %v696
    %v729 = vadd.f32 %v665, %v697
    %v730 = vadd.f32 %v666, %v698
    %v731 = vadd.f32 %v667, %v699
    %v732 = vmul.f32 %v700, 0.33333334
    %v733 = vmul.f32 %v701, 0.33333334
    %v734 = vmul.f32 %v702, 0.33333334
    %v735 = vmul.f32 %v703, 0.33333334
    %v736 = vmul.f32 %v704, 0.33333334
    %v737 = vmul.f32 %v705, 0.33333334
    %v738 = vmul.f32 %v706, 0.33333334
    %v739 = vmul.f32 %v707, 0.33333334
    %v740 = vmul.f32 %v708, 0.33333334
    %v741 = vmul.f32 %v709, 0.33333334
    %v742 = vmul.f32 %v710, 0.33333334
    %v743 = vmul.f32 %v711, 0.33333334
    %v744 = vmul.f32 %v712, 0.33333334
    %v745 = vmul.f32 %v713, 0.33333334
    %v746 = vmul.f32 %v714, 0.33333334
    %v747 = vmul.f32 %v715, 0.33333334
    %v748 = vmul.f32 %v716, 0.33333334
    %v749 = vmul.f32 %v717, 0.33333334
    %v750 = vmul.f32 %v718, 0.33333334
    %v751 = vmul.f32 %v719, 0.33333334
    %v752 = vmul.f32 %v720, 0.33333334
    %v753 = vmul.f32 %v721, 0.33333334
    %v754 = vmul.f32 %v722, 0.33333334
    %v755 = vmul.f32 %v723, 0.33333334
    %v756 = vmul.f32 %v724, 0.33333334
    %v757 = vmul.f32 %v725, 0.33333334
    %v758 = vmul.f32 %v726, 0.33333334
    %v759 = vmul.f32 %v727, 0.33333334
    %v760 = vmul.f32 %v728, 0.33333334
    %v761 = vmul.f32 %v729, 0.33333334
    %v762 = vmul.f32 %v730, 0.33333334
    %v763 = vmul.f32 %v731, 0.33333334
    %764 = vst [vmem:[%s3] sm:$0xff] %v732
    %765 = vst [vmem:[%s3 + $0x8] sm:$0xff] %v733
    %766 = vst [vmem:[%s3 + $0x10] sm:$0xff] %v734
    %767 = vst [vmem:[%s3 + $0x18] sm:$0xff] %v735
    %768 = vst [vmem:[%s3 + $0x20] sm:$0xff] %v736
    %769 = vst [vmem:[%s3 + $0x28] sm:$0xff] %v737
    %770 = vst [vmem:[%s3 + $0x30] sm:$0xff] %v738
    %771 = vst [vmem:[%s3 + $0x38] sm:$0xff] %v739
    %772 = vst [vmem:[%s3 + $0x40] sm:$0xff] %v740
    %773 = vst [vmem:[%s3 + $0x48] sm:$0xff] %v741
    %774 = vst [vmem:[%s3 + $0x50] sm:$0xff] %v742
    %775 = vst [vmem:[%s3 + $0x58] sm:$0xff] %v743
    %776 = vst [vmem:[%s3 + $0x60] sm:$0xff] %v744
    %777 = vst [vmem:[%s3 + $0x68] sm:$0xff] %v745
    %778 = vst [vmem:[%s3 + $0x70] sm:$0xff] %v746
    %779 = vst [vmem:[%s3 + $0x78] sm:$0xff] %v747
    %780 = vst [vmem:[%s3 + $0x80] sm:$0xff] %v748
    %781 = vst [vmem:[%s3 + $0x88] sm:$0xff] %v749
    %782 = vst [vmem:[%s3 + $0x90] sm:$0xff] %v750
    %783 = vst [vmem:[%s3 + $0x98] sm:$0xff] %v751
    %784 = vst [vmem:[%s3 + $0xa0] sm:$0xff] %v752
    %785 = vst [vmem:[%s3 + $0xa8] sm:$0xff] %v753
    %786 = vst [vmem:[%s3 + $0xb0] sm:$0xff] %v754
    %787 = vst [vmem:[%s3 + $0xb8] sm:$0xff] %v755
    %788 = vst [vmem:[%s3 + $0xc0] sm:$0xff] %v756
    %789 = vst [vmem:[%s3 + $0xc8] sm:$0xff] %v757
    %790 = vst [vmem:[%s3 + $0xd0] sm:$0xff] %v758
    %791 = vst [vmem:[%s3 + $0xd8] sm:$0xff] %v759
    %792 = vst [vmem:[%s3 + $0xe0] sm:$0xff] %v760
    %793 = vst [vmem:[%s3 + $0xe8] sm:$0xff] %v761
    %794 = vst [vmem:[%s3 + $0xf0] sm:$0xff] %v762
    %795 = vst [vmem:[%s3 + $0xf8] sm:$0xff] %v763
  $region21: #{lightgcn_forward.4} parent=0 // pred_fallthru
    _
  // Predicated region
  $region22: #{lightgcn_forward.4} parent=0 // pred_check
    _
  $region23: #{lightgcn_forward.4} parent=0 // pred_check_branch
    %797 = sbr.rel (0) target = $region25
  $region24: #{lightgcn_forward.4} parent=0 // pred_region
    _
  $region25: #{lightgcn_forward.4} parent=0 // pred_fallthru
    _
  // Predicated region
  $region26: #{lightgcn_forward.4} parent=0 // pred_check
    _
  $region27: #{lightgcn_forward.4} parent=0 // pred_check_branch
    %799 = sbr.rel (0) target = $region29
  $region28: #{lightgcn_forward.4} parent=0 // pred_region
    _
  $region29: #{lightgcn_forward.4} parent=0 // pred_fallthru
    _

// kernel: lightgcn_forward.3
$region0: #{lightgcn_forward.3}
  #allocation0 [shape = 'u32[]', space=smem, size = 0x4, offset = 0x4, fixed_abs, tag = 'smem constant byte address 0x4 - core index']
  #allocation1 [shape = 'u32[144,128]{1,0:T(1,128)}', space=vmem, size = 0x12000, scoped, tag = 'internal scratch']
  #allocation2 [shape = 'f32[256,128]{1,0:T(8,128)}', space=vmem, size = 0x20000, scoped, tag = 'scratch operand']
  %s0 = inlined_call_operand.vmem [shape: bf16[256,256], index: 0, kind: input, shape index: {}]
  %s1 = inlined_call_operand.vmem [shape: bf16[256,128], index: 1, kind: input, shape index: {}]
  %s2 = inlined_call_operand.vmem [shape: f32[256,128], index: 2, kind: input, shape index: {}, may-alias: {2,4}]
  %s3 = inlined_call_operand.vmem [shape: bf16[256,128], index: 3, kind: output, shape index: {0}]
  %s4 = inlined_call_operand.vmem [shape: f32[256,128], index: 4, kind: output, shape index: {1}, may-alias: {2,4}]
  %5 = xla_tuple %s3, %s4
  %s6 = sld [smem:[#allocation0]]
  $region38: #{lightgcn_forward.3} parent=0
    _
  %s8 = ssub.s32 1, %s6
  %s9 = scalar_select 0, %s8, %s6
  // Predicated region
  $region2: #{lightgcn_forward.3} parent=0 // pred_check
    _
  $region3: #{lightgcn_forward.3} parent=0 // pred_check_branch
    %11 = sbr.rel (0) target = $region5
  $region4: #{lightgcn_forward.3} parent=0 // pred_region
    _
  $region5: #{lightgcn_forward.3} parent=0 // pred_fallthru
    _
  // Predicated region
  $region6: #{lightgcn_forward.3} parent=0 // pred_check
    _
  $region7: #{lightgcn_forward.3} parent=0 // pred_check_branch
    %13 = sbr.rel (0) target = $region9
  $region8: #{lightgcn_forward.3} parent=0 // pred_region
    _
  $region9: #{lightgcn_forward.3} parent=0 // pred_fallthru
    _
  // Predicated region
  $region10: #{lightgcn_forward.3} parent=0 // pred_check
    _
  $region11: #{lightgcn_forward.3} parent=0 // pred_check_branch
    %15 = sbr.rel (0) target = $region13
  $region12: #{lightgcn_forward.3} parent=0 // pred_region
    _
  $region13: #{lightgcn_forward.3} parent=0 // pred_fallthru
    _
  %p17 = scmp.eq.s32.totalorder 0, 0
  // Predicated region
  $region14: #{lightgcn_forward.3} parent=0 // pred_check
    %p18 = pneg %p17
  $region15: #{lightgcn_forward.3} parent=0 // pred_check_branch
    %20 = sbr.rel (%p18) target = $region17
  $region16: #{lightgcn_forward.3} parent=0 // pred_region
    %21 = vst [vmem:[#allocation2] sm:$0xff] 0.0
    %22 = vst [vmem:[#allocation2 + $0x8] sm:$0xff] 0.0
    %23 = vst [vmem:[#allocation2 + $0x10] sm:$0xff] 0.0
    %24 = vst [vmem:[#allocation2 + $0x18] sm:$0xff] 0.0
    %25 = vst [vmem:[#allocation2 + $0x20] sm:$0xff] 0.0
    %26 = vst [vmem:[#allocation2 + $0x28] sm:$0xff] 0.0
    %27 = vst [vmem:[#allocation2 + $0x30] sm:$0xff] 0.0
    %28 = vst [vmem:[#allocation2 + $0x38] sm:$0xff] 0.0
    %29 = vst [vmem:[#allocation2 + $0x40] sm:$0xff] 0.0
    %30 = vst [vmem:[#allocation2 + $0x48] sm:$0xff] 0.0
    %31 = vst [vmem:[#allocation2 + $0x50] sm:$0xff] 0.0
    %32 = vst [vmem:[#allocation2 + $0x58] sm:$0xff] 0.0
    %33 = vst [vmem:[#allocation2 + $0x60] sm:$0xff] 0.0
    %34 = vst [vmem:[#allocation2 + $0x68] sm:$0xff] 0.0
    %35 = vst [vmem:[#allocation2 + $0x70] sm:$0xff] 0.0
    %36 = vst [vmem:[#allocation2 + $0x78] sm:$0xff] 0.0
    %37 = vst [vmem:[#allocation2 + $0x80] sm:$0xff] 0.0
    %38 = vst [vmem:[#allocation2 + $0x88] sm:$0xff] 0.0
    %39 = vst [vmem:[#allocation2 + $0x90] sm:$0xff] 0.0
    %40 = vst [vmem:[#allocation2 + $0x98] sm:$0xff] 0.0
    %41 = vst [vmem:[#allocation2 + $0xa0] sm:$0xff] 0.0
    %42 = vst [vmem:[#allocation2 + $0xa8] sm:$0xff] 0.0
    %43 = vst [vmem:[#allocation2 + $0xb0] sm:$0xff] 0.0
    %44 = vst [vmem:[#allocation2 + $0xb8] sm:$0xff] 0.0
    %45 = vst [vmem:[#allocation2 + $0xc0] sm:$0xff] 0.0
    %46 = vst [vmem:[#allocation2 + $0xc8] sm:$0xff] 0.0
    %47 = vst [vmem:[#allocation2 + $0xd0] sm:$0xff] 0.0
    %48 = vst [vmem:[#allocation2 + $0xd8] sm:$0xff] 0.0
    %49 = vst [vmem:[#allocation2 + $0xe0] sm:$0xff] 0.0
    %50 = vst [vmem:[#allocation2 + $0xe8] sm:$0xff] 0.0
    %51 = vst [vmem:[#allocation2 + $0xf0] sm:$0xff] 0.0
    %52 = vst [vmem:[#allocation2 + $0xf8] sm:$0xff] 0.0
  $region17: #{lightgcn_forward.3} parent=0 // pred_fallthru
    _
  %s53 = smul.u32 0, 256
  %s54 = sshra.s32 %s53, 3
  %s55 = sand.u32 %s53, 7
  %s56 = smul.addr %s54, 4
  %s57 = scalar_lea.vmem %s1, %s56
  %v58 = vld [vmem:[%s57] sm:$0xf]
  %v59 = vld [vmem:[%s57 + $0x4] sm:$0xf]
  %v60 = vld [vmem:[%s57 + $0x8] sm:$0xf]
  %v61 = vld [vmem:[%s57 + $0xc] sm:$0xf]
  %v62 = vld [vmem:[%s57 + $0x10] sm:$0xf]
  %v63 = vld [vmem:[%s57 + $0x14] sm:$0xf]
  %v64 = vld [vmem:[%s57 + $0x18] sm:$0xf]
  %v65 = vld [vmem:[%s57 + $0x1c] sm:$0xf]
  %v66 = vld [vmem:[%s57 + $0x20] sm:$0xf]
  %v67 = vld [vmem:[%s57 + $0x24] sm:$0xf]
  %v68 = vld [vmem:[%s57 + $0x28] sm:$0xf]
  %v69 = vld [vmem:[%s57 + $0x2c] sm:$0xf]
  %v70 = vld [vmem:[%s57 + $0x30] sm:$0xf]
  %v71 = vld [vmem:[%s57 + $0x34] sm:$0xf]
  %v72 = vld [vmem:[%s57 + $0x38] sm:$0xf]
  %v73 = vld [vmem:[%s57 + $0x3c] sm:$0xf]
  %v74 = vld [vmem:[%s57 + $0x40] sm:$0xf]
  %v75 = vld [vmem:[%s57 + $0x44] sm:$0xf]
  %v76 = vld [vmem:[%s57 + $0x48] sm:$0xf]
  %v77 = vld [vmem:[%s57 + $0x4c] sm:$0xf]
  %v78 = vld [vmem:[%s57 + $0x50] sm:$0xf]
  %v79 = vld [vmem:[%s57 + $0x54] sm:$0xf]
  %v80 = vld [vmem:[%s57 + $0x58] sm:$0xf]
  %v81 = vld [vmem:[%s57 + $0x5c] sm:$0xf]
  %v82 = vld [vmem:[%s57 + $0x60] sm:$0xf]
  %v83 = vld [vmem:[%s57 + $0x64] sm:$0xf]
  %v84 = vld [vmem:[%s57 + $0x68] sm:$0xf]
  %v85 = vld [vmem:[%s57 + $0x6c] sm:$0xf]
  %v86 = vld [vmem:[%s57 + $0x70] sm:$0xf]
  %v87 = vld [vmem:[%s57 + $0x74] sm:$0xf]
  %v88 = vld [vmem:[%s57 + $0x78] sm:$0xf]
  %v89 = vld [vmem:[%s57 + $0x7c] sm:$0xf]
  %v90 = vld [vmem:[#allocation2] sm:$0xff]
  %v91 = vld [vmem:[#allocation2 + $0x8] sm:$0xff]
  %v92 = vld [vmem:[#allocation2 + $0x10] sm:$0xff]
  %v93 = vld [vmem:[#allocation2 + $0x18] sm:$0xff]
  %v94 = vld [vmem:[#allocation2 + $0x20] sm:$0xff]
  %v95 = vld [vmem:[#allocation2 + $0x28] sm:$0xff]
  %v96 = vld [vmem:[#allocation2 + $0x30] sm:$0xff]
  %v97 = vld [vmem:[#allocation2 + $0x38] sm:$0xff]
  %v98 = vld [vmem:[#allocation2 + $0x40] sm:$0xff]
  %v99 = vld [vmem:[#allocation2 + $0x48] sm:$0xff]
  %v100 = vld [vmem:[#allocation2 + $0x50] sm:$0xff]
  %v101 = vld [vmem:[#allocation2 + $0x58] sm:$0xff]
  %v102 = vld [vmem:[#allocation2 + $0x60] sm:$0xff]
  %v103 = vld [vmem:[#allocation2 + $0x68] sm:$0xff]
  %v104 = vld [vmem:[#allocation2 + $0x70] sm:$0xff]
  %v105 = vld [vmem:[#allocation2 + $0x78] sm:$0xff]
  %v106 = vld [vmem:[#allocation2 + $0x80] sm:$0xff]
  %v107 = vld [vmem:[#allocation2 + $0x88] sm:$0xff]
  %v108 = vld [vmem:[#allocation2 + $0x90] sm:$0xff]
  %v109 = vld [vmem:[#allocation2 + $0x98] sm:$0xff]
  %v110 = vld [vmem:[#allocation2 + $0xa0] sm:$0xff]
  %v111 = vld [vmem:[#allocation2 + $0xa8] sm:$0xff]
  %v112 = vld [vmem:[#allocation2 + $0xb0] sm:$0xff]
  %v113 = vld [vmem:[#allocation2 + $0xb8] sm:$0xff]
  %v114 = vld [vmem:[#allocation2 + $0xc0] sm:$0xff]
  %v115 = vld [vmem:[#allocation2 + $0xc8] sm:$0xff]
  %v116 = vld [vmem:[#allocation2 + $0xd0] sm:$0xff]
  %v117 = vld [vmem:[#allocation2 + $0xd8] sm:$0xff]
  %v118 = vld [vmem:[#allocation2 + $0xe0] sm:$0xff]
  %v119 = vld [vmem:[#allocation2 + $0xe8] sm:$0xff]
  %v120 = vld [vmem:[#allocation2 + $0xf0] sm:$0xff]
  %v121 = vld [vmem:[#allocation2 + $0xf8] sm:$0xff]
  %v122 = vld [vmem:[%s0] sm:$0xff]
  %v123 = vld [vmem:[%s0 + $0x8] sm:$0xff]
  %v124 = vld [vmem:[%s0 + $0x10] sm:$0xff]
  %v125 = vld [vmem:[%s0 + $0x18] sm:$0xff]
  %v126 = vld [vmem:[%s0 + $0x20] sm:$0xff]
  %v127 = vld [vmem:[%s0 + $0x28] sm:$0xff]
  %v128 = vld [vmem:[%s0 + $0x30] sm:$0xff]
  %v129 = vld [vmem:[%s0 + $0x38] sm:$0xff]
  %v130 = vld [vmem:[%s0 + $0x40] sm:$0xff]
  %v131 = vld [vmem:[%s0 + $0x48] sm:$0xff]
  %v132 = vld [vmem:[%s0 + $0x50] sm:$0xff]
  %v133 = vld [vmem:[%s0 + $0x58] sm:$0xff]
  %v134 = vld [vmem:[%s0 + $0x60] sm:$0xff]
  %v135 = vld [vmem:[%s0 + $0x68] sm:$0xff]
  %v136 = vld [vmem:[%s0 + $0x70] sm:$0xff]
  %v137 = vld [vmem:[%s0 + $0x78] sm:$0xff]
  %v138 = vld [vmem:[%s0 + $0x80] sm:$0xff]
  %v139 = vld [vmem:[%s0 + $0x88] sm:$0xff]
  %v140 = vld [vmem:[%s0 + $0x90] sm:$0xff]
  %v141 = vld [vmem:[%s0 + $0x98] sm:$0xff]
  %v142 = vld [vmem:[%s0 + $0xa0] sm:$0xff]
  %v143 = vld [vmem:[%s0 + $0xa8] sm:$0xff]
  %v144 = vld [vmem:[%s0 + $0xb0] sm:$0xff]
  %v145 = vld [vmem:[%s0 + $0xb8] sm:$0xff]
  %v146 = vld [vmem:[%s0 + $0xc0] sm:$0xff]
  %v147 = vld [vmem:[%s0 + $0xc8] sm:$0xff]
  %v148 = vld [vmem:[%s0 + $0xd0] sm:$0xff]
  %v149 = vld [vmem:[%s0 + $0xd8] sm:$0xff]
  %v150 = vld [vmem:[%s0 + $0xe0] sm:$0xff]
  %v151 = vld [vmem:[%s0 + $0xe8] sm:$0xff]
  %v152 = vld [vmem:[%s0 + $0xf0] sm:$0xff]
  %v153 = vld [vmem:[%s0 + $0xf8] sm:$0xff]
  %v186 = vunpack.c.l.b16 %v122
  %v187 = vunpack.c.h.b16 %v122
  %v188 = vunpack.c.l.b16 %v123
  %v189 = vunpack.c.h.b16 %v123
  %v190 = vunpack.c.l.b16 %v124
  %v191 = vunpack.c.h.b16 %v124
  %v192 = vunpack.c.l.b16 %v125
  %v193 = vunpack.c.h.b16 %v125
  %v194 = vunpack.c.l.b16 %v126
  %v195 = vunpack.c.h.b16 %v126
  %v196 = vunpack.c.l.b16 %v127
  %v197 = vunpack.c.h.b16 %v127
  %v198 = vunpack.c.l.b16 %v128
  %v199 = vunpack.c.h.b16 %v128
  %v200 = vunpack.c.l.b16 %v129
  %v201 = vunpack.c.h.b16 %v129
  %v202 = vunpack.c.l.b16 %v130
  %v203 = vunpack.c.h.b16 %v130
  %v204 = vunpack.c.l.b16 %v131
  %v205 = vunpack.c.h.b16 %v131
  %v206 = vunpack.c.l.b16 %v132
  %v207 = vunpack.c.h.b16 %v132
  %v208 = vunpack.c.l.b16 %v133
  %v209 = vunpack.c.h.b16 %v133
  %v210 = vunpack.c.l.b16 %v134
  %v211 = vunpack.c.h.b16 %v134
  %v212 = vunpack.c.l.b16 %v135
  %v213 = vunpack.c.h.b16 %v135
  %v214 = vunpack.c.l.b16 %v136
  %v215 = vunpack.c.h.b16 %v136
  %v216 = vunpack.c.l.b16 %v137
  %v217 = vunpack.c.h.b16 %v137
  %v218 = vunpack.c.l.b16 %v138
  %v219 = vunpack.c.h.b16 %v138
  %v220 = vunpack.c.l.b16 %v139
  %v221 = vunpack.c.h.b16 %v139
  %v222 = vunpack.c.l.b16 %v140
  %v223 = vunpack.c.h.b16 %v140
  %v224 = vunpack.c.l.b16 %v141
  %v225 = vunpack.c.h.b16 %v141
  %v226 = vunpack.c.l.b16 %v142
  %v227 = vunpack.c.h.b16 %v142
  %v228 = vunpack.c.l.b16 %v143
  %v229 = vunpack.c.h.b16 %v143
  %v230 = vunpack.c.l.b16 %v144
  %v231 = vunpack.c.h.b16 %v144
  %v232 = vunpack.c.l.b16 %v145
  %v233 = vunpack.c.h.b16 %v145
  %v234 = vunpack.c.l.b16 %v146
  %v235 = vunpack.c.h.b16 %v146
  %v236 = vunpack.c.l.b16 %v147
  %v237 = vunpack.c.h.b16 %v147
  %v238 = vunpack.c.l.b16 %v148
  %v239 = vunpack.c.h.b16 %v148
  %v240 = vunpack.c.l.b16 %v149
  %v241 = vunpack.c.h.b16 %v149
  %v242 = vunpack.c.l.b16 %v150
  %v243 = vunpack.c.h.b16 %v150
  %v244 = vunpack.c.l.b16 %v151
  %v245 = vunpack.c.h.b16 %v151
  %v246 = vunpack.c.l.b16 %v152
  %v247 = vunpack.c.h.b16 %v152
  %v248 = vunpack.c.l.b16 %v153
  %v249 = vunpack.c.h.b16 %v153
  %v250 = vpack.c.b16 %v188, %v186
  %v251 = vpack.c.b16 %v189, %v187
  %v252 = vpack.c.b16 %v192, %v190
  %v253 = vpack.c.b16 %v193, %v191
  %v254 = vpack.c.b16 %v196, %v194
  %v255 = vpack.c.b16 %v197, %v195
  %v256 = vpack.c.b16 %v200, %v198
  %v257 = vpack.c.b16 %v201, %v199
  %v258 = vpack.c.b16 %v204, %v202
  %v259 = vpack.c.b16 %v205, %v203
  %v260 = vpack.c.b16 %v208, %v206
  %v261 = vpack.c.b16 %v209, %v207
  %v262 = vpack.c.b16 %v212, %v210
  %v263 = vpack.c.b16 %v213, %v211
  %v264 = vpack.c.b16 %v216, %v214
  %v265 = vpack.c.b16 %v217, %v215
  %v266 = vpack.c.b16 %v220, %v218
  %v267 = vpack.c.b16 %v221, %v219
  %v268 = vpack.c.b16 %v224, %v222
  %v269 = vpack.c.b16 %v225, %v223
  %v270 = vpack.c.b16 %v228, %v226
  %v271 = vpack.c.b16 %v229, %v227
  %v272 = vpack.c.b16 %v232, %v230
  %v273 = vpack.c.b16 %v233, %v231
  %v274 = vpack.c.b16 %v236, %v234
  %v275 = vpack.c.b16 %v237, %v235
  %v276 = vpack.c.b16 %v240, %v238
  %v277 = vpack.c.b16 %v241, %v239
  %v278 = vpack.c.b16 %v244, %v242
  %v279 = vpack.c.b16 %v245, %v243
  %v280 = vpack.c.b16 %v248, %v246
  %v281 = vpack.c.b16 %v249, %v247
  %v346 = vunpack.c.l.b16 %v58
  %v347 = vunpack.c.l.b16 %v59
  %v348 = vunpack.c.l.b16 %v60
  %v349 = vunpack.c.l.b16 %v61
  %v350 = vunpack.c.l.b16 %v62
  %v351 = vunpack.c.l.b16 %v63
  %v352 = vunpack.c.l.b16 %v64
  %v353 = vunpack.c.l.b16 %v65
  %v354 = vunpack.c.l.b16 %v66
  %v355 = vunpack.c.l.b16 %v67
  %v356 = vunpack.c.l.b16 %v68
  %v357 = vunpack.c.l.b16 %v69
  %v358 = vunpack.c.l.b16 %v70
  %v359 = vunpack.c.l.b16 %v71
  %v360 = vunpack.c.l.b16 %v72
  %v361 = vunpack.c.l.b16 %v73
  %v362 = vunpack.c.l.b16 %v74
  %v363 = vunpack.c.l.b16 %v75
  %v364 = vunpack.c.l.b16 %v76
  %v365 = vunpack.c.l.b16 %v77
  %v366 = vunpack.c.l.b16 %v78
  %v367 = vunpack.c.l.b16 %v79
  %v368 = vunpack.c.l.b16 %v80
  %v369 = vunpack.c.l.b16 %v81
  %v370 = vunpack.c.l.b16 %v82
  %v371 = vunpack.c.l.b16 %v83
  %v372 = vunpack.c.l.b16 %v84
  %v373 = vunpack.c.l.b16 %v85
  %v374 = vunpack.c.l.b16 %v86
  %v375 = vunpack.c.l.b16 %v87
  %v376 = vunpack.c.l.b16 %v88
  %v377 = vunpack.c.l.b16 %v89
  %v378 = vpack.c.b16 %v347, %v346
  %v379 = vpack.c.b16 %v349, %v348
  %v380 = vpack.c.b16 %v351, %v350
  %v381 = vpack.c.b16 %v353, %v352
  %v382 = vpack.c.b16 %v355, %v354
  %v383 = vpack.c.b16 %v357, %v356
  %v384 = vpack.c.b16 %v359, %v358
  %v385 = vpack.c.b16 %v361, %v360
  %v386 = vpack.c.b16 %v363, %v362
  %v387 = vpack.c.b16 %v365, %v364
  %v388 = vpack.c.b16 %v367, %v366
  %v389 = vpack.c.b16 %v369, %v368
  %v390 = vpack.c.b16 %v371, %v370
  %v391 = vpack.c.b16 %v373, %v372
  %v392 = vpack.c.b16 %v375, %v374
  %v393 = vpack.c.b16 %v377, %v376
  %410 = vmatprep.subr.bf16.mxu0 0
  %411 = vmatpush1.bf16.msra.mxu0 %v378
  %412 = vmatprep.subr.bf16.mxu0 0
  %413 = vmatpush1.bf16.msra.mxu0 %v379
  %414 = vmatprep.subr.bf16.mxu0 0
  %415 = vmatpush1.bf16.msra.mxu0 %v380
  %416 = vmatprep.subr.bf16.mxu0 0
  %417 = vmatpush1.bf16.msra.mxu0 %v381
  %418 = vmatprep.subr.bf16.mxu0 0
  %419 = vmatpush1.bf16.msra.mxu0 %v382
  %420 = vmatprep.subr.bf16.mxu0 0
  %421 = vmatpush1.bf16.msra.mxu0 %v383
  %422 = vmatprep.subr.bf16.mxu0 0
  %423 = vmatpush1.bf16.msra.mxu0 %v384
  %424 = vmatprep.subr.bf16.mxu0 0
  %425 = vmatpush1.bf16.msra.mxu0 %v385
  %426 = vmatprep.subr.bf16.mxu0 0
  %427 = vmatpush1.bf16.msra.mxu0 %v386
  %428 = vmatprep.subr.bf16.mxu0 0
  %429 = vmatpush1.bf16.msra.mxu0 %v387
  %430 = vmatprep.subr.bf16.mxu0 0
  %431 = vmatpush1.bf16.msra.mxu0 %v388
  %432 = vmatprep.subr.bf16.mxu0 0
  %433 = vmatpush1.bf16.msra.mxu0 %v389
  %434 = vmatprep.subr.bf16.mxu0 0
  %435 = vmatpush1.bf16.msra.mxu0 %v390
  %436 = vmatprep.subr.bf16.mxu0 0
  %437 = vmatpush1.bf16.msra.mxu0 %v391
  %438 = vmatprep.subr.bf16.mxu0 0
  %439 = vmatpush1.bf16.msra.mxu0 %v392
  %440 = vmatprep.subr.bf16.mxu0 0
  %441 = vmatpush1.bf16.msra.mxu0 %v393
  %442 = vmatprep.mubr.bf16.mxu0 %v251
  %443 = vmatmul.mubr.bf16.gmra.mrb[0].mxu0 %v250
  %v444 = vpop.f32.mrb[0].mxu0
  %v445 = vadd.f32 0.0, %v444
  %v446 = vpop.f32.mrb[0].mxu0
  %v447 = vpop.f32.mrb[0].mxu0
  %v448 = vadd.f32 0.0, %v447
  %v449 = vpop.f32.mrb[0].mxu0
  %450 = vmatprep.mubr.bf16.mxu0 %v253
  %451 = vmatmul.mubr.bf16.gmra.mrb[0].mxu0 %v252
  %v452 = vpop.f32.mrb[0].mxu0
  %v453 = vadd.f32 0.0, %v452
  %v454 = vpop.f32.mrb[0].mxu0
  %v455 = vpop.f32.mrb[0].mxu0
  %v456 = vadd.f32 0.0, %v455
  %v457 = vpop.f32.mrb[0].mxu0
  %458 = vmatprep.mubr.bf16.mxu0 %v255
  %459 = vmatmul.mubr.bf16.gmra.mrb[0].mxu0 %v254
  %v460 = vpop.f32.mrb[0].mxu0
  %v461 = vadd.f32 0.0, %v460
  %v462 = vpop.f32.mrb[0].mxu0
  %v463 = vpop.f32.mrb[0].mxu0
  %v464 = vadd.f32 0.0, %v463
  %v465 = vpop.f32.mrb[0].mxu0
  %466 = vmatprep.mubr.bf16.mxu0 %v257
  %467 = vmatmul.mubr.bf16.gmra.mrb[0].mxu0 %v256
  %v468 = vpop.f32.mrb[0].mxu0
  %v469 = vadd.f32 0.0, %v468
  %v470 = vpop.f32.mrb[0].mxu0
  %v471 = vpop.f32.mrb[0].mxu0
  %v472 = vadd.f32 0.0, %v471
  %v473 = vpop.f32.mrb[0].mxu0
  %474 = vmatprep.mubr.bf16.mxu0 %v259
  %475 = vmatmul.mubr.bf16.gmra.mrb[0].mxu0 %v258
  %v476 = vpop.f32.mrb[0].mxu0
  %v477 = vadd.f32 0.0, %v476
  %v478 = vpop.f32.mrb[0].mxu0
  %v479 = vpop.f32.mrb[0].mxu0
  %v480 = vadd.f32 0.0, %v479
  %v481 = vpop.f32.mrb[0].mxu0
  %482 = vmatprep.mubr.bf16.mxu0 %v261
  %483 = vmatmul.mubr.bf16.gmra.mrb[0].mxu0 %v260
  %v484 = vpop.f32.mrb[0].mxu0
  %v485 = vadd.f32 0.0, %v484
  %v486 = vpop.f32.mrb[0].mxu0
  %v487 = vpop.f32.mrb[0].mxu0
  %v488 = vadd.f32 0.0, %v487
  %v489 = vpop.f32.mrb[0].mxu0
  %490 = vmatprep.mubr.bf16.mxu0 %v263
  %491 = vmatmul.mubr.bf16.gmra.mrb[0].mxu0 %v262
  %v492 = vpop.f32.mrb[0].mxu0
  %v493 = vadd.f32 0.0, %v492
  %v494 = vpop.f32.mrb[0].mxu0
  %v495 = vpop.f32.mrb[0].mxu0
  %v496 = vadd.f32 0.0, %v495
  %v497 = vpop.f32.mrb[0].mxu0
  %498 = vmatprep.mubr.bf16.mxu0 %v265
  %499 = vmatmul.mubr.bf16.gmra.mrb[0].mxu0 %v264
  %v500 = vpop.f32.mrb[0].mxu0
  %v501 = vadd.f32 0.0, %v500
  %v502 = vpop.f32.mrb[0].mxu0
  %v503 = vpop.f32.mrb[0].mxu0
  %v504 = vadd.f32 0.0, %v503
  %v505 = vpop.f32.mrb[0].mxu0
  %506 = vmatprep.mubr.bf16.mxu0 %v267
  %507 = vmatmul.mubr.bf16.gmra.mrb[0].mxu0 %v266
  %v508 = vpop.f32.mrb[0].mxu0
  %v509 = vadd.f32 0.0, %v508
  %v510 = vpop.f32.mrb[0].mxu0
  %v511 = vpop.f32.mrb[0].mxu0
  %v512 = vadd.f32 0.0, %v511
  %v513 = vpop.f32.mrb[0].mxu0
  %514 = vmatprep.mubr.bf16.mxu0 %v269
  %515 = vmatmul.mubr.bf16.gmra.mrb[0].mxu0 %v268
  %v516 = vpop.f32.mrb[0].mxu0
  %v517 = vadd.f32 0.0, %v516
  %v518 = vpop.f32.mrb[0].mxu0
  %v519 = vpop.f32.mrb[0].mxu0
  %v520 = vadd.f32 0.0, %v519
  %v521 = vpop.f32.mrb[0].mxu0
  %522 = vmatprep.mubr.bf16.mxu0 %v271
  %523 = vmatmul.mubr.bf16.gmra.mrb[0].mxu0 %v270
  %v524 = vpop.f32.mrb[0].mxu0
  %v525 = vadd.f32 0.0, %v524
  %v526 = vpop.f32.mrb[0].mxu0
  %v527 = vpop.f32.mrb[0].mxu0
  %v528 = vadd.f32 0.0, %v527
  %v529 = vpop.f32.mrb[0].mxu0
  %530 = vmatprep.mubr.bf16.mxu0 %v273
  %531 = vmatmul.mubr.bf16.gmra.mrb[0].mxu0 %v272
  %v532 = vpop.f32.mrb[0].mxu0
  %v533 = vadd.f32 0.0, %v532
  %v534 = vpop.f32.mrb[0].mxu0
  %v535 = vpop.f32.mrb[0].mxu0
  %v536 = vadd.f32 0.0, %v535
  %v537 = vpop.f32.mrb[0].mxu0
  %538 = vmatprep.mubr.bf16.mxu0 %v275
  %539 = vmatmul.mubr.bf16.gmra.mrb[0].mxu0 %v274
  %v540 = vpop.f32.mrb[0].mxu0
  %v541 = vadd.f32 0.0, %v540
  %v542 = vpop.f32.mrb[0].mxu0
  %v543 = vpop.f32.mrb[0].mxu0
  %v544 = vadd.f32 0.0, %v543
  %v545 = vpop.f32.mrb[0].mxu0
  %546 = vmatprep.mubr.bf16.mxu0 %v277
  %547 = vmatmul.mubr.bf16.gmra.mrb[0].mxu0 %v276
  %v548 = vpop.f32.mrb[0].mxu0
  %v549 = vadd.f32 0.0, %v548
  %v550 = vpop.f32.mrb[0].mxu0
  %v551 = vpop.f32.mrb[0].mxu0
  %v552 = vadd.f32 0.0, %v551
  %v553 = vpop.f32.mrb[0].mxu0
  %554 = vmatprep.mubr.bf16.mxu0 %v279
  %555 = vmatmul.mubr.bf16.gmra.mrb[0].mxu0 %v278
  %v556 = vpop.f32.mrb[0].mxu0
  %v557 = vadd.f32 0.0, %v556
  %v558 = vpop.f32.mrb[0].mxu0
  %v559 = vpop.f32.mrb[0].mxu0
  %v560 = vadd.f32 0.0, %v559
  %v561 = vpop.f32.mrb[0].mxu0
  %562 = vmatprep.mubr.bf16.mxu0 %v281
  %563 = vmatmul.mubr.bf16.gmra.mrb[0].mxu0 %v280
  %v564 = vpop.f32.mrb[0].mxu0
  %v565 = vadd.f32 0.0, %v564
  %v566 = vpop.f32.mrb[0].mxu0
  %v567 = vpop.f32.mrb[0].mxu0
  %v568 = vadd.f32 0.0, %v567
  %v569 = vpop.f32.mrb[0].mxu0
  %570 = vdwg.mxu0
  %v571 = vadd.f32 %v90, %v445
  %v572 = vadd.f32 %v91, %v448
  %v573 = vadd.f32 %v92, %v453
  %v574 = vadd.f32 %v93, %v456
  %v575 = vadd.f32 %v94, %v461
  %v576 = vadd.f32 %v95, %v464
  %v577 = vadd.f32 %v96, %v469
  %v578 = vadd.f32 %v97, %v472
  %v579 = vadd.f32 %v98, %v477
  %v580 = vadd.f32 %v99, %v480
  %v581 = vadd.f32 %v100, %v485
  %v582 = vadd.f32 %v101, %v488
  %v583 = vadd.f32 %v102, %v493
  %v584 = vadd.f32 %v103, %v496
  %v585 = vadd.f32 %v104, %v501
  %v586 = vadd.f32 %v105, %v504
  %v587 = vadd.f32 %v106, %v509
  %v588 = vadd.f32 %v107, %v512
  %v589 = vadd.f32 %v108, %v517
  %v590 = vadd.f32 %v109, %v520
  %v591 = vadd.f32 %v110, %v525
  %v592 = vadd.f32 %v111, %v528
  %v593 = vadd.f32 %v112, %v533
  %v594 = vadd.f32 %v113, %v536
  %v595 = vadd.f32 %v114, %v541
  %v596 = vadd.f32 %v115, %v544
  %v597 = vadd.f32 %v116, %v549
  %v598 = vadd.f32 %v117, %v552
  %v599 = vadd.f32 %v118, %v557
  %v600 = vadd.f32 %v119, %v560
  %v601 = vadd.f32 %v120, %v565
  %v602 = vadd.f32 %v121, %v568
  %603 = vst [vmem:[#allocation2] sm:$0xff] %v571
  %604 = vst [vmem:[#allocation2 + $0x8] sm:$0xff] %v572
  %605 = vst [vmem:[#allocation2 + $0x10] sm:$0xff] %v573
  %606 = vst [vmem:[#allocation2 + $0x18] sm:$0xff] %v574
  %607 = vst [vmem:[#allocation2 + $0x20] sm:$0xff] %v575
  %608 = vst [vmem:[#allocation2 + $0x28] sm:$0xff] %v576
  %609 = vst [vmem:[#allocation2 + $0x30] sm:$0xff] %v577
  %610 = vst [vmem:[#allocation2 + $0x38] sm:$0xff] %v578
  %611 = vst [vmem:[#allocation2 + $0x40] sm:$0xff] %v579
  %612 = vst [vmem:[#allocation2 + $0x48] sm:$0xff] %v580
  %613 = vst [vmem:[#allocation2 + $0x50] sm:$0xff] %v581
  %614 = vst [vmem:[#allocation2 + $0x58] sm:$0xff] %v582
  %615 = vst [vmem:[#allocation2 + $0x60] sm:$0xff] %v583
  %616 = vst [vmem:[#allocation2 + $0x68] sm:$0xff] %v584
  %617 = vst [vmem:[#allocation2 + $0x70] sm:$0xff] %v585
  %618 = vst [vmem:[#allocation2 + $0x78] sm:$0xff] %v586
  %619 = vst [vmem:[#allocation2 + $0x80] sm:$0xff] %v587
  %620 = vst [vmem:[#allocation2 + $0x88] sm:$0xff] %v588
  %621 = vst [vmem:[#allocation2 + $0x90] sm:$0xff] %v589
  %622 = vst [vmem:[#allocation2 + $0x98] sm:$0xff] %v590
  %623 = vst [vmem:[#allocation2 + $0xa0] sm:$0xff] %v591
  %624 = vst [vmem:[#allocation2 + $0xa8] sm:$0xff] %v592
  %625 = vst [vmem:[#allocation2 + $0xb0] sm:$0xff] %v593
  %626 = vst [vmem:[#allocation2 + $0xb8] sm:$0xff] %v594
  %627 = vst [vmem:[#allocation2 + $0xc0] sm:$0xff] %v595
  %628 = vst [vmem:[#allocation2 + $0xc8] sm:$0xff] %v596
  %629 = vst [vmem:[#allocation2 + $0xd0] sm:$0xff] %v597
  %630 = vst [vmem:[#allocation2 + $0xd8] sm:$0xff] %v598
  %631 = vst [vmem:[#allocation2 + $0xe0] sm:$0xff] %v599
  %632 = vst [vmem:[#allocation2 + $0xe8] sm:$0xff] %v600
  %633 = vst [vmem:[#allocation2 + $0xf0] sm:$0xff] %v601
  %634 = vst [vmem:[#allocation2 + $0xf8] sm:$0xff] %v602
  // Predicated region
  $region18: #{lightgcn_forward.3} parent=0 // pred_check
    %p635 = pneg %p17
  $region19: #{lightgcn_forward.3} parent=0 // pred_check_branch
    %637 = sbr.rel (%p635) target = $region21
  $region20: #{lightgcn_forward.3} parent=0 // pred_region
    %v638 = vld [vmem:[#allocation2] sm:$0xff]
    %v639 = vld [vmem:[#allocation2 + $0x8] sm:$0xff]
    %v640 = vld [vmem:[#allocation2 + $0x10] sm:$0xff]
    %v641 = vld [vmem:[#allocation2 + $0x18] sm:$0xff]
    %v642 = vld [vmem:[#allocation2 + $0x20] sm:$0xff]
    %v643 = vld [vmem:[#allocation2 + $0x28] sm:$0xff]
    %v644 = vld [vmem:[#allocation2 + $0x30] sm:$0xff]
    %v645 = vld [vmem:[#allocation2 + $0x38] sm:$0xff]
    %v646 = vld [vmem:[#allocation2 + $0x40] sm:$0xff]
    %v647 = vld [vmem:[#allocation2 + $0x48] sm:$0xff]
    %v648 = vld [vmem:[#allocation2 + $0x50] sm:$0xff]
    %v649 = vld [vmem:[#allocation2 + $0x58] sm:$0xff]
    %v650 = vld [vmem:[#allocation2 + $0x60] sm:$0xff]
    %v651 = vld [vmem:[#allocation2 + $0x68] sm:$0xff]
    %v652 = vld [vmem:[#allocation2 + $0x70] sm:$0xff]
    %v653 = vld [vmem:[#allocation2 + $0x78] sm:$0xff]
    %v654 = vld [vmem:[#allocation2 + $0x80] sm:$0xff]
    %v655 = vld [vmem:[#allocation2 + $0x88] sm:$0xff]
    %v656 = vld [vmem:[#allocation2 + $0x90] sm:$0xff]
    %v657 = vld [vmem:[#allocation2 + $0x98] sm:$0xff]
    %v658 = vld [vmem:[#allocation2 + $0xa0] sm:$0xff]
    %v659 = vld [vmem:[#allocation2 + $0xa8] sm:$0xff]
    %v660 = vld [vmem:[#allocation2 + $0xb0] sm:$0xff]
    %v661 = vld [vmem:[#allocation2 + $0xb8] sm:$0xff]
    %v662 = vld [vmem:[#allocation2 + $0xc0] sm:$0xff]
    %v663 = vld [vmem:[#allocation2 + $0xc8] sm:$0xff]
    %v664 = vld [vmem:[#allocation2 + $0xd0] sm:$0xff]
    %v665 = vld [vmem:[#allocation2 + $0xd8] sm:$0xff]
    %v666 = vld [vmem:[#allocation2 + $0xe0] sm:$0xff]
    %v667 = vld [vmem:[#allocation2 + $0xe8] sm:$0xff]
    %v668 = vld [vmem:[#allocation2 + $0xf0] sm:$0xff]
    %v669 = vld [vmem:[#allocation2 + $0xf8] sm:$0xff]
    %v670 = vpack.c.bf16 %v639, %v638
    %v671 = vpack.c.bf16 %v641, %v640
    %v672 = vpack.c.bf16 %v643, %v642
    %v673 = vpack.c.bf16 %v645, %v644
    %v674 = vpack.c.bf16 %v647, %v646
    %v675 = vpack.c.bf16 %v649, %v648
    %v676 = vpack.c.bf16 %v651, %v650
    %v677 = vpack.c.bf16 %v653, %v652
    %v678 = vpack.c.bf16 %v655, %v654
    %v679 = vpack.c.bf16 %v657, %v656
    %v680 = vpack.c.bf16 %v659, %v658
    %v681 = vpack.c.bf16 %v661, %v660
    %v682 = vpack.c.bf16 %v663, %v662
    %v683 = vpack.c.bf16 %v665, %v664
    %v684 = vpack.c.bf16 %v667, %v666
    %v685 = vpack.c.bf16 %v669, %v668
    %v702 = vunpack.c.l.b16 %v670
    %v703 = vunpack.c.h.b16 %v670
    %v704 = vunpack.c.l.b16 %v671
    %v705 = vunpack.c.h.b16 %v671
    %v706 = vunpack.c.l.b16 %v672
    %v707 = vunpack.c.h.b16 %v672
    %v708 = vunpack.c.l.b16 %v673
    %v709 = vunpack.c.h.b16 %v673
    %v710 = vunpack.c.l.b16 %v674
    %v711 = vunpack.c.h.b16 %v674
    %v712 = vunpack.c.l.b16 %v675
    %v713 = vunpack.c.h.b16 %v675
    %v714 = vunpack.c.l.b16 %v676
    %v715 = vunpack.c.h.b16 %v676
    %v716 = vunpack.c.l.b16 %v677
    %v717 = vunpack.c.h.b16 %v677
    %v718 = vunpack.c.l.b16 %v678
    %v719 = vunpack.c.h.b16 %v678
    %v720 = vunpack.c.l.b16 %v679
    %v721 = vunpack.c.h.b16 %v679
    %v722 = vunpack.c.l.b16 %v680
    %v723 = vunpack.c.h.b16 %v680
    %v724 = vunpack.c.l.b16 %v681
    %v725 = vunpack.c.h.b16 %v681
    %v726 = vunpack.c.l.b16 %v682
    %v727 = vunpack.c.h.b16 %v682
    %v728 = vunpack.c.l.b16 %v683
    %v729 = vunpack.c.h.b16 %v683
    %v730 = vunpack.c.l.b16 %v684
    %v731 = vunpack.c.h.b16 %v684
    %v732 = vunpack.c.l.b16 %v685
    %v733 = vunpack.c.h.b16 %v685
    %v734 = vpack.c.b16 %v702, %v702
    %v735 = vpack.c.b16 %v703, %v703
    %v736 = vpack.c.b16 %v704, %v704
    %v737 = vpack.c.b16 %v705, %v705
    %v738 = vpack.c.b16 %v706, %v706
    %v739 = vpack.c.b16 %v707, %v707
    %v740 = vpack.c.b16 %v708, %v708
    %v741 = vpack.c.b16 %v709, %v709
    %v742 = vpack.c.b16 %v710, %v710
    %v743 = vpack.c.b16 %v711, %v711
    %v744 = vpack.c.b16 %v712, %v712
    %v745 = vpack.c.b16 %v713, %v713
    %v746 = vpack.c.b16 %v714, %v714
    %v747 = vpack.c.b16 %v715, %v715
    %v748 = vpack.c.b16 %v716, %v716
    %v749 = vpack.c.b16 %v717, %v717
    %v750 = vpack.c.b16 %v718, %v718
    %v751 = vpack.c.b16 %v719, %v719
    %v752 = vpack.c.b16 %v720, %v720
    %v753 = vpack.c.b16 %v721, %v721
    %v754 = vpack.c.b16 %v722, %v722
    %v755 = vpack.c.b16 %v723, %v723
    %v756 = vpack.c.b16 %v724, %v724
    %v757 = vpack.c.b16 %v725, %v725
    %v758 = vpack.c.b16 %v726, %v726
    %v759 = vpack.c.b16 %v727, %v727
    %v760 = vpack.c.b16 %v728, %v728
    %v761 = vpack.c.b16 %v729, %v729
    %v762 = vpack.c.b16 %v730, %v730
    %v763 = vpack.c.b16 %v731, %v731
    %v764 = vpack.c.b16 %v732, %v732
    %v765 = vpack.c.b16 %v733, %v733
    %798 = vst [vmem:[%s3] sm:$0xf] %v734
    %799 = vst [vmem:[%s3 + $0x4] sm:$0xf] %v735
    %800 = vst [vmem:[%s3 + $0x8] sm:$0xf] %v736
    %801 = vst [vmem:[%s3 + $0xc] sm:$0xf] %v737
    %802 = vst [vmem:[%s3 + $0x10] sm:$0xf] %v738
    %803 = vst [vmem:[%s3 + $0x14] sm:$0xf] %v739
    %804 = vst [vmem:[%s3 + $0x18] sm:$0xf] %v740
    %805 = vst [vmem:[%s3 + $0x1c] sm:$0xf] %v741
    %806 = vst [vmem:[%s3 + $0x20] sm:$0xf] %v742
    %807 = vst [vmem:[%s3 + $0x24] sm:$0xf] %v743
    %808 = vst [vmem:[%s3 + $0x28] sm:$0xf] %v744
    %809 = vst [vmem:[%s3 + $0x2c] sm:$0xf] %v745
    %810 = vst [vmem:[%s3 + $0x30] sm:$0xf] %v746
    %811 = vst [vmem:[%s3 + $0x34] sm:$0xf] %v747
    %812 = vst [vmem:[%s3 + $0x38] sm:$0xf] %v748
    %813 = vst [vmem:[%s3 + $0x3c] sm:$0xf] %v749
    %814 = vst [vmem:[%s3 + $0x40] sm:$0xf] %v750
    %815 = vst [vmem:[%s3 + $0x44] sm:$0xf] %v751
    %816 = vst [vmem:[%s3 + $0x48] sm:$0xf] %v752
    %817 = vst [vmem:[%s3 + $0x4c] sm:$0xf] %v753
    %818 = vst [vmem:[%s3 + $0x50] sm:$0xf] %v754
    %819 = vst [vmem:[%s3 + $0x54] sm:$0xf] %v755
    %820 = vst [vmem:[%s3 + $0x58] sm:$0xf] %v756
    %821 = vst [vmem:[%s3 + $0x5c] sm:$0xf] %v757
    %822 = vst [vmem:[%s3 + $0x60] sm:$0xf] %v758
    %823 = vst [vmem:[%s3 + $0x64] sm:$0xf] %v759
    %824 = vst [vmem:[%s3 + $0x68] sm:$0xf] %v760
    %825 = vst [vmem:[%s3 + $0x6c] sm:$0xf] %v761
    %826 = vst [vmem:[%s3 + $0x70] sm:$0xf] %v762
    %827 = vst [vmem:[%s3 + $0x74] sm:$0xf] %v763
    %828 = vst [vmem:[%s3 + $0x78] sm:$0xf] %v764
    %829 = vst [vmem:[%s3 + $0x7c] sm:$0xf] %v765
    %v830 = vld [vmem:[%s2] sm:$0xff]
    %v831 = vld [vmem:[%s2 + $0x8] sm:$0xff]
    %v832 = vld [vmem:[%s2 + $0x10] sm:$0xff]
    %v833 = vld [vmem:[%s2 + $0x18] sm:$0xff]
    %v834 = vld [vmem:[%s2 + $0x20] sm:$0xff]
    %v835 = vld [vmem:[%s2 + $0x28] sm:$0xff]
    %v836 = vld [vmem:[%s2 + $0x30] sm:$0xff]
    %v837 = vld [vmem:[%s2 + $0x38] sm:$0xff]
    %v838 = vld [vmem:[%s2 + $0x40] sm:$0xff]
    %v839 = vld [vmem:[%s2 + $0x48] sm:$0xff]
    %v840 = vld [vmem:[%s2 + $0x50] sm:$0xff]
    %v841 = vld [vmem:[%s2 + $0x58] sm:$0xff]
    %v842 = vld [vmem:[%s2 + $0x60] sm:$0xff]
    %v843 = vld [vmem:[%s2 + $0x68] sm:$0xff]
    %v844 = vld [vmem:[%s2 + $0x70] sm:$0xff]
    %v845 = vld [vmem:[%s2 + $0x78] sm:$0xff]
    %v846 = vld [vmem:[%s2 + $0x80] sm:$0xff]
    %v847 = vld [vmem:[%s2 + $0x88] sm:$0xff]
    %v848 = vld [vmem:[%s2 + $0x90] sm:$0xff]
    %v849 = vld [vmem:[%s2 + $0x98] sm:$0xff]
    %v850 = vld [vmem:[%s2 + $0xa0] sm:$0xff]
    %v851 = vld [vmem:[%s2 + $0xa8] sm:$0xff]
    %v852 = vld [vmem:[%s2 + $0xb0] sm:$0xff]
    %v853 = vld [vmem:[%s2 + $0xb8] sm:$0xff]
    %v854 = vld [vmem:[%s2 + $0xc0] sm:$0xff]
    %v855 = vld [vmem:[%s2 + $0xc8] sm:$0xff]
    %v856 = vld [vmem:[%s2 + $0xd0] sm:$0xff]
    %v857 = vld [vmem:[%s2 + $0xd8] sm:$0xff]
    %v858 = vld [vmem:[%s2 + $0xe0] sm:$0xff]
    %v859 = vld [vmem:[%s2 + $0xe8] sm:$0xff]
    %v860 = vld [vmem:[%s2 + $0xf0] sm:$0xff]
    %v861 = vld [vmem:[%s2 + $0xf8] sm:$0xff]
    %v862 = vld [vmem:[#allocation2] sm:$0xff]
    %v863 = vld [vmem:[#allocation2 + $0x8] sm:$0xff]
    %v864 = vld [vmem:[#allocation2 + $0x10] sm:$0xff]
    %v865 = vld [vmem:[#allocation2 + $0x18] sm:$0xff]
    %v866 = vld [vmem:[#allocation2 + $0x20] sm:$0xff]
    %v867 = vld [vmem:[#allocation2 + $0x28] sm:$0xff]
    %v868 = vld [vmem:[#allocation2 + $0x30] sm:$0xff]
    %v869 = vld [vmem:[#allocation2 + $0x38] sm:$0xff]
    %v870 = vld [vmem:[#allocation2 + $0x40] sm:$0xff]
    %v871 = vld [vmem:[#allocation2 + $0x48] sm:$0xff]
    %v872 = vld [vmem:[#allocation2 + $0x50] sm:$0xff]
    %v873 = vld [vmem:[#allocation2 + $0x58] sm:$0xff]
    %v874 = vld [vmem:[#allocation2 + $0x60] sm:$0xff]
    %v875 = vld [vmem:[#allocation2 + $0x68] sm:$0xff]
    %v876 = vld [vmem:[#allocation2 + $0x70] sm:$0xff]
    %v877 = vld [vmem:[#allocation2 + $0x78] sm:$0xff]
    %v878 = vld [vmem:[#allocation2 + $0x80] sm:$0xff]
    %v879 = vld [vmem:[#allocation2 + $0x88] sm:$0xff]
    %v880 = vld [vmem:[#allocation2 + $0x90] sm:$0xff]
    %v881 = vld [vmem:[#allocation2 + $0x98] sm:$0xff]
    %v882 = vld [vmem:[#allocation2 + $0xa0] sm:$0xff]
    %v883 = vld [vmem:[#allocation2 + $0xa8] sm:$0xff]
    %v884 = vld [vmem:[#allocation2 + $0xb0] sm:$0xff]
    %v885 = vld [vmem:[#allocation2 + $0xb8] sm:$0xff]
    %v886 = vld [vmem:[#allocation2 + $0xc0] sm:$0xff]
    %v887 = vld [vmem:[#allocation2 + $0xc8] sm:$0xff]
    %v888 = vld [vmem:[#allocation2 + $0xd0] sm:$0xff]
    %v889 = vld [vmem:[#allocation2 + $0xd8] sm:$0xff]
    %v890 = vld [vmem:[#allocation2 + $0xe0] sm:$0xff]
    %v891 = vld [vmem:[#allocation2 + $0xe8] sm:$0xff]
    %v892 = vld [vmem:[#allocation2 + $0xf0] sm:$0xff]
    %v893 = vld [vmem:[#allocation2 + $0xf8] sm:$0xff]
    %v894 = vadd.f32 %v830, %v862
    %v895 = vadd.f32 %v831, %v863
    %v896 = vadd.f32 %v832, %v864
    %v897 = vadd.f32 %v833, %v865
    %v898 = vadd.f32 %v834, %v866
    %v899 = vadd.f32 %v835, %v867
    %v900 = vadd.f32 %v836, %v868
    %v901 = vadd.f32 %v837, %v869
    %v902 = vadd.f32 %v838, %v870
    %v903 = vadd.f32 %v839, %v871
    %v904 = vadd.f32 %v840, %v872
    %v905 = vadd.f32 %v841, %v873
    %v906 = vadd.f32 %v842, %v874
    %v907 = vadd.f32 %v843, %v875
    %v908 = vadd.f32 %v844, %v876
    %v909 = vadd.f32 %v845, %v877
    %v910 = vadd.f32 %v846, %v878
    %v911 = vadd.f32 %v847, %v879
    %v912 = vadd.f32 %v848, %v880
    %v913 = vadd.f32 %v849, %v881
    %v914 = vadd.f32 %v850, %v882
    %v915 = vadd.f32 %v851, %v883
    %v916 = vadd.f32 %v852, %v884
    %v917 = vadd.f32 %v853, %v885
    %v918 = vadd.f32 %v854, %v886
    %v919 = vadd.f32 %v855, %v887
    %v920 = vadd.f32 %v856, %v888
    %v921 = vadd.f32 %v857, %v889
    %v922 = vadd.f32 %v858, %v890
    %v923 = vadd.f32 %v859, %v891
    %v924 = vadd.f32 %v860, %v892
    %v925 = vadd.f32 %v861, %v893
    %926 = vst [vmem:[%s4] sm:$0xff] %v894
    %927 = vst [vmem:[%s4 + $0x8] sm:$0xff] %v895
    %928 = vst [vmem:[%s4 + $0x10] sm:$0xff] %v896
    %929 = vst [vmem:[%s4 + $0x18] sm:$0xff] %v897
    %930 = vst [vmem:[%s4 + $0x20] sm:$0xff] %v898
    %931 = vst [vmem:[%s4 + $0x28] sm:$0xff] %v899
    %932 = vst [vmem:[%s4 + $0x30] sm:$0xff] %v900
    %933 = vst [vmem:[%s4 + $0x38] sm:$0xff] %v901
    %934 = vst [vmem:[%s4 + $0x40] sm:$0xff] %v902
    %935 = vst [vmem:[%s4 + $0x48] sm:$0xff] %v903
    %936 = vst [vmem:[%s4 + $0x50] sm:$0xff] %v904
    %937 = vst [vmem:[%s4 + $0x58] sm:$0xff] %v905
    %938 = vst [vmem:[%s4 + $0x60] sm:$0xff] %v906
    %939 = vst [vmem:[%s4 + $0x68] sm:$0xff] %v907
    %940 = vst [vmem:[%s4 + $0x70] sm:$0xff] %v908
    %941 = vst [vmem:[%s4 + $0x78] sm:$0xff] %v909
    %942 = vst [vmem:[%s4 + $0x80] sm:$0xff] %v910
    %943 = vst [vmem:[%s4 + $0x88] sm:$0xff] %v911
    %944 = vst [vmem:[%s4 + $0x90] sm:$0xff] %v912
    %945 = vst [vmem:[%s4 + $0x98] sm:$0xff] %v913
    %946 = vst [vmem:[%s4 + $0xa0] sm:$0xff] %v914
    %947 = vst [vmem:[%s4 + $0xa8] sm:$0xff] %v915
    %948 = vst [vmem:[%s4 + $0xb0] sm:$0xff] %v916
    %949 = vst [vmem:[%s4 + $0xb8] sm:$0xff] %v917
    %950 = vst [vmem:[%s4 + $0xc0] sm:$0xff] %v918
    %951 = vst [vmem:[%s4 + $0xc8] sm:$0xff] %v919
    %952 = vst [vmem:[%s4 + $0xd0] sm:$0xff] %v920
    %953 = vst [vmem:[%s4 + $0xd8] sm:$0xff] %v921
    %954 = vst [vmem:[%s4 + $0xe0] sm:$0xff] %v922
    %955 = vst [vmem:[%s4 + $0xe8] sm:$0xff] %v923
    %956 = vst [vmem:[%s4 + $0xf0] sm:$0xff] %v924
    %957 = vst [vmem:[%s4 + $0xf8] sm:$0xff] %v925
  $region21: #{lightgcn_forward.3} parent=0 // pred_fallthru
    _
  // Predicated region
  $region22: #{lightgcn_forward.3} parent=0 // pred_check
    _
  $region23: #{lightgcn_forward.3} parent=0 // pred_check_branch
    %959 = sbr.rel (0) target = $region25
  $region24: #{lightgcn_forward.3} parent=0 // pred_region
    _
  $region25: #{lightgcn_forward.3} parent=0 // pred_fallthru
    _
  // Predicated region
  $region26: #{lightgcn_forward.3} parent=0 // pred_check
    _
  $region27: #{lightgcn_forward.3} parent=0 // pred_check_branch
    %961 = sbr.rel (0) target = $region29
  $region28: #{lightgcn_forward.3} parent=0 // pred_region
    _
  $region29: #{lightgcn_forward.3} parent=0 // pred_fallthru
    _
  // Predicated region
  $region30: #{lightgcn_forward.3} parent=0 // pred_check
    _
  $region31: #{lightgcn_forward.3} parent=0 // pred_check_branch
    %963 = sbr.rel (0) target = $region33
  $region32: #{lightgcn_forward.3} parent=0 // pred_region
    _
  $region33: #{lightgcn_forward.3} parent=0 // pred_fallthru
    _
  // Predicated region
  $region34: #{lightgcn_forward.3} parent=0 // pred_check
    _
  $region35: #{lightgcn_forward.3} parent=0 // pred_check_branch
    %965 = sbr.rel (0) target = $region37
  $region36: #{lightgcn_forward.3} parent=0 // pred_region
    _
  $region37: #{lightgcn_forward.3} parent=0 // pred_fallthru
    _

</llo_original>
